<compile_context>
chip_gen: v7x
topology: tpu7x:2x2x1
jax: 0.10.0
libtpu: 0.0.40
codegen_flags: <defaults>
</compile_context>

<pallas_src>
import jax
import jax.numpy as jnp
import numpy as np
from jax.experimental import pallas as pl
from jax.experimental.pallas import tpu as pltpu

TOK_BLOCK = 1024  # tokens per grid step (mult. of 256); step overhead amortized ~4x vs 256


def _pick_sub():
    """One-hot sub-chunk rows: match the MXU row count per generation."""
    try:
        kind = jax.devices()[0].device_kind.lower()
    except Exception:
        return 128
    # v2-v5 MXUs are 128x128; v6e/v7x are 256x256.
    if any(tag in kind for tag in ("v2", "v3", "v4", "v5")):
        return 128
    return 256


SUB = _pick_sub()
assert TOK_BLOCK % SUB == 0


def embedding_lookup_kernel(ids_ref, table_ref, out_ref):
    """ids_ref: (TOK_BLOCK, 1) int32 VMEM; table_ref: (Vp, D) f32 VMEM (resident);
    out_ref: (TOK_BLOCK, D) f32 VMEM."""
    vp = table_ref.shape[0]
    # Hoist the lane-index iota once (JAX does not CSE broadcast_in_dim); it is
    # sublane-replicated so its vreg cost is ~nil.  Do NOT hoist the table into
    # vregs: re-reading it from VMEM per chunk rides the slack vld slots and
    # keeps live vreg pressure under the 64-register file.
    col = jax.lax.broadcasted_iota(jnp.int32, (SUB, vp), 1)

    def chunk(c, carry):
        r = pl.multiple_of(c * SUB, SUB)
        ids = ids_ref[pl.ds(r, SUB), :]                        # (SUB, 1), broadcast on lanes
        onehot = (ids == col).astype(table_ref.dtype)          # (SUB, Vp) lane-dense
        out_ref[pl.ds(r, SUB), :] = jnp.dot(
            onehot, table_ref[...],                            # table streamed from VMEM
            preferred_element_type=jnp.float32)                # (SUB, D) on the MXU
        return carry

    jax.lax.fori_loop(0, TOK_BLOCK // SUB, chunk, 0, unroll=True)


def prepare_embedding_table(table):
    """Pad the vocab axis up to a multiple of 128 and cast to f32, ONCE at init.
    (Was previously done inside every forward call.)"""
    V, D = table.shape
    vp = ((V + 127) // 128) * 128
    return jnp.pad(table.astype(jnp.float32), ((0, vp - V), (0, 0)))


def embedding_forward(ids, table_p):
    """Equivalent of nn.Embedding(ids): gather rows of the (pre-padded) table.
    ids: (B, S) int; table_p: (Vp, D) f32 with Vp % 128 == 0."""
    B, S = ids.shape
    Vp, D = table_p.shape
    assert Vp % 128 == 0, "pass the table through prepare_embedding_table() first"
    N = B * S

    # NOTE: ids ride in a (TOK_BLOCK, 1) VMEM tile -> a narrow masked DMA per
    # step broadcast on lanes inside the kernel; ~1% overhead at this size.
    flat = ids.reshape(N, 1).astype(jnp.int32)

    out = pl.pallas_call(
        embedding_lookup_kernel,
        out_shape=jax.ShapeDtypeStruct((N, D), jnp.float32),
        grid_spec=pltpu.PrefetchScalarGridSpec(
            num_scalar_prefetch=0,
            grid=(pl.cdiv(N, TOK_BLOCK),),            # ragged tail masked by Pallas
            in_specs=[
                pl.BlockSpec((TOK_BLOCK, 1), lambda i: (i, 0)),   # token-id block
                pl.BlockSpec((Vp, D), lambda i: (0, 0)),          # full table, VMEM-resident
            ],
            out_specs=pl.BlockSpec((TOK_BLOCK, D), lambda i: (i, 0)),
        ),
        compiler_params=pltpu.CompilerParams(
            dimension_semantics=("parallel",)),       # shard grid steps across TCs (v7x)
    )(flat, table_p)

    return out.reshape(B, S, D)


def build_parameters(key, n_tracks=62, emb_dim=128,
                     n_albums_raw=10, n_artists_raw=12):
    """Deterministic synthetic stand-in for the data_manager-driven __init__."""
    n_tokens = n_tracks + 2  # V
    k_song, k_alb, k_art, k_pop, k_dur = jax.random.split(key, 5)

    # self.embedding: zeros everywhere, rows [1 : 1+song_length) = song embeddings.
    song_emb = jax.random.normal(k_song, (n_tracks, emb_dim), dtype=jnp.float32)
    song_length = min(song_emb.shape[0], n_tokens - 2)
    enhanced = jnp.zeros((n_tokens, emb_dim), dtype=jnp.float32)
    enhanced = enhanced.at[1:1 + song_length, :].set(song_emb[:song_length, :emb_dim])

    # Auxiliary state (unused by forward, built for shape fidelity only).
    n_albums = n_albums_raw + 2
    album_table = jnp.zeros((n_albums, emb_dim), jnp.float32).at[1:-1, :].set(
        jax.random.normal(k_alb, (n_albums - 2, emb_dim), dtype=jnp.float32))
    n_artists = n_artists_raw + 2
    artist_table = jnp.zeros((n_artists, emb_dim), jnp.float32).at[1:-1, :].set(
        jax.random.normal(k_art, (n_artists - 2, emb_dim), dtype=jnp.float32))
    pop_table = jax.random.normal(k_pop, (101, emb_dim), dtype=jnp.float32)
    dur_table = jax.random.normal(k_dur, (101, emb_dim), dtype=jnp.float32)

    aux = dict(album_embedding=album_table, artist_embedding=artist_table,
               pop_embedding=pop_table, dur_embedding=dur_table)
    return enhanced, aux


if __name__ == "__main__":
    key = jax.random.PRNGKey(0)
    k_param, k_ids, k_ids2 = jax.random.split(key, 3)

    n_tracks, emb_dim = 62, 128
    V = n_tracks + 2
    table, _aux = build_parameters(k_param, n_tracks=n_tracks, emb_dim=emb_dim)
    table_p = prepare_embedding_table(table)   # pad/cast once, off the hot path

    # Small case consistent with the module's forward: x is (batch, seq) of token ids.
    B, S = 2, 8
    x = jax.random.randint(k_ids, (B, S), 0, V, dtype=jnp.int32)
    y = jax.block_until_ready(embedding_forward(x, table_p))
    ref = jnp.take(table, x, axis=0)
    np.testing.assert_allclose(np.asarray(y), np.asarray(ref), rtol=1e-6, atol=1e-6)
    assert y.shape == (B, S, emb_dim) and y.dtype == jnp.float32

    # Multi-grid-step case with a ragged tail (N = 1500 = 1024 + 476) to exercise
    # partial-block masking (no host pad / no output slice).
    B2, S2 = 5, 300
    x2 = jax.random.randint(k_ids2, (B2, S2), 0, V, dtype=jnp.int32)
    y2 = jax.block_until_ready(embedding_forward(x2, table_p))
    ref2 = jnp.take(table, x2, axis=0)
    np.testing.assert_allclose(np.asarray(y2), np.asarray(ref2), rtol=1e-6, atol=1e-6)
    assert y2.shape == (B2, S2, emb_dim) and y2.dtype == jnp.float32

    print("KERNEL_OK")
</pallas_src>

<mosaic_0001>
module attributes {stable_mosaic.version = 11 : i64} {
  func.func @embedding_lookup_kernel(%arg0: i32, %arg1: memref<1024x1xi32, #tpu.memory_space<vmem>>, %arg2: memref<128x128xf32, #tpu.memory_space<vmem>>, %arg3: memref<1024x128xf32, #tpu.memory_space<vmem>>) attributes {dimension_semantics = [#tpu.dimension_semantics<parallel>], iteration_bounds = array<i64: 1>, scalar_prefetch = 0 : i64, scratch_operands = 0 : i64, tpu.core_type = #tpu.core_type<tc>, window_params = [{transform_indices = @transform_0, window_bounds = array<i64: 1024, 1>}, {pipeline_mode = #tpu.pipeline_mode<synchronous>, transform_indices = @transform_1, window_bounds = array<i64: 128, 128>}, {transform_indices = @transform_2, window_bounds = array<i64: 1024, 128>}]} {
    %0 = tpu.iota {dimensions = array<i32: 1>} : vector<256x128xi32>
    %c0_i32 = arith.constant 0 : i32
    %c256_i32 = arith.constant 256 : i32
    %1 = arith.muli %c0_i32, %c256_i32 : i32
    %2 = tpu.assume_multiple %1, 256 : i32
    %3 = arith.index_cast %2 : i32 to index
    %c0 = arith.constant 0 : index
    %4 = vector.load %arg1[%3, %c0] : memref<1024x1xi32, #tpu.memory_space<vmem>>, vector<256x1xi32>
    %5 = vector.broadcast %4 : vector<256x1xi32> to vector<256x128xi32>
    %6 = arith.cmpi eq, %5, %0 : vector<256x128xi32>
    %7 = arith.extui %6 : vector<256x128xi1> to vector<256x128xi32>
    %8 = arith.sitofp %7 : vector<256x128xi32> to vector<256x128xf32>
    %c0_0 = arith.constant 0 : index
    %c0_1 = arith.constant 0 : index
    %9 = vector.load %arg2[%c0_0, %c0_1] : memref<128x128xf32, #tpu.memory_space<vmem>>, vector<128x128xf32>
    %cst = arith.constant dense<0.000000e+00> : vector<256x128xf32>
    %10 = tpu.matmul %8, %9, %cst {dimension_numbers = #tpu.dot_dimension_numbers<[1], [0], [0], [1], [0, 0, 1, 1], [], []>} : vector<256x128xf32>, vector<128x128xf32>, vector<256x128xf32> -> vector<256x128xf32>
    %11 = arith.index_cast %2 : i32 to index
    %c0_2 = arith.constant 0 : index
    %12 = vector.load %arg3[%11, %c0_2] : memref<1024x128xf32, #tpu.memory_space<vmem>>, vector<256x128xf32>
    tpu.vector_store %arg3[%11, %c0_2], %10 {strides = array<i32>} : memref<1024x128xf32, #tpu.memory_space<vmem>>, vector<256x128xf32>,
    %c1_i32 = arith.constant 1 : i32
    %c256_i32_3 = arith.constant 256 : i32
    %13 = arith.muli %c1_i32, %c256_i32_3 : i32
    %14 = tpu.assume_multiple %13, 256 : i32
    %15 = arith.index_cast %14 : i32 to index
    %c0_4 = arith.constant 0 : index
    %16 = vector.load %arg1[%15, %c0_4] : memref<1024x1xi32, #tpu.memory_space<vmem>>, vector<256x1xi32>
    %17 = vector.broadcast %16 : vector<256x1xi32> to vector<256x128xi32>
    %18 = arith.cmpi eq, %17, %0 : vector<256x128xi32>
    %19 = arith.extui %18 : vector<256x128xi1> to vector<256x128xi32>
    %20 = arith.sitofp %19 : vector<256x128xi32> to vector<256x128xf32>
    %c0_5 = arith.constant 0 : index
    %c0_6 = arith.constant 0 : index
    %21 = vector.load %arg2[%c0_5, %c0_6] : memref<128x128xf32, #tpu.memory_space<vmem>>, vector<128x128xf32>
    %cst_7 = arith.constant dense<0.000000e+00> : vector<256x128xf32>
    %22 = tpu.matmul %20, %21, %cst_7 {dimension_numbers = #tpu.dot_dimension_numbers<[1], [0], [0], [1], [0, 0, 1, 1], [], []>} : vector<256x128xf32>, vector<128x128xf32>, vector<256x128xf32> -> vector<256x128xf32>
    %23 = arith.index_cast %14 : i32 to index
    %c0_8 = arith.constant 0 : index
    %24 = vector.load %arg3[%23, %c0_8] : memref<1024x128xf32, #tpu.memory_space<vmem>>, vector<256x128xf32>
    tpu.vector_store %arg3[%23, %c0_8], %22 {strides = array<i32>} : memref<1024x128xf32, #tpu.memory_space<vmem>>, vector<256x128xf32>,
    %c2_i32 = arith.constant 2 : i32
    %c256_i32_9 = arith.constant 256 : i32
    %25 = arith.muli %c2_i32, %c256_i32_9 : i32
    %26 = tpu.assume_multiple %25, 256 : i32
    %27 = arith.index_cast %26 : i32 to index
    %c0_10 = arith.constant 0 : index
    %28 = vector.load %arg1[%27, %c0_10] : memref<1024x1xi32, #tpu.memory_space<vmem>>, vector<256x1xi32>
    %29 = vector.broadcast %28 : vector<256x1xi32> to vector<256x128xi32>
    %30 = arith.cmpi eq, %29, %0 : vector<256x128xi32>
    %31 = arith.extui %30 : vector<256x128xi1> to vector<256x128xi32>
    %32 = arith.sitofp %31 : vector<256x128xi32> to vector<256x128xf32>
    %c0_11 = arith.constant 0 : index
    %c0_12 = arith.constant 0 : index
    %33 = vector.load %arg2[%c0_11, %c0_12] : memref<128x128xf32, #tpu.memory_space<vmem>>, vector<128x128xf32>
    %cst_13 = arith.constant dense<0.000000e+00> : vector<256x128xf32>
    %34 = tpu.matmul %32, %33, %cst_13 {dimension_numbers = #tpu.dot_dimension_numbers<[1], [0], [0], [1], [0, 0, 1, 1], [], []>} : vector<256x128xf32>, vector<128x128xf32>, vector<256x128xf32> -> vector<256x128xf32>
    %35 = arith.index_cast %26 : i32 to index
    %c0_14 = arith.constant 0 : index
    %36 = vector.load %arg3[%35, %c0_14] : memref<1024x128xf32, #tpu.memory_space<vmem>>, vector<256x128xf32>
    tpu.vector_store %arg3[%35, %c0_14], %34 {strides = array<i32>} : memref<1024x128xf32, #tpu.memory_space<vmem>>, vector<256x128xf32>,
    %c3_i32 = arith.constant 3 : i32
    %c256_i32_15 = arith.constant 256 : i32
    %37 = arith.muli %c3_i32, %c256_i32_15 : i32
    %38 = tpu.assume_multiple %37, 256 : i32
    %39 = arith.index_cast %38 : i32 to index
    %c0_16 = arith.constant 0 : index
    %40 = vector.load %arg1[%39, %c0_16] : memref<1024x1xi32, #tpu.memory_space<vmem>>, vector<256x1xi32>
    %41 = vector.broadcast %40 : vector<256x1xi32> to vector<256x128xi32>
    %42 = arith.cmpi eq, %41, %0 : vector<256x128xi32>
    %43 = arith.extui %42 : vector<256x128xi1> to vector<256x128xi32>
    %44 = arith.sitofp %43 : vector<256x128xi32> to vector<256x128xf32>
    %c0_17 = arith.constant 0 : index
    %c0_18 = arith.constant 0 : index
    %45 = vector.load %arg2[%c0_17, %c0_18] : memref<128x128xf32, #tpu.memory_space<vmem>>, vector<128x128xf32>
    %cst_19 = arith.constant dense<0.000000e+00> : vector<256x128xf32>
    %46 = tpu.matmul %44, %45, %cst_19 {dimension_numbers = #tpu.dot_dimension_numbers<[1], [0], [0], [1], [0, 0, 1, 1], [], []>} : vector<256x128xf32>, vector<128x128xf32>, vector<256x128xf32> -> vector<256x128xf32>
    %47 = arith.index_cast %38 : i32 to index
    %c0_20 = arith.constant 0 : index
    %48 = vector.load %arg3[%47, %c0_20] : memref<1024x128xf32, #tpu.memory_space<vmem>>, vector<256x128xf32>
    tpu.vector_store %arg3[%47, %c0_20], %46 {strides = array<i32>} : memref<1024x128xf32, #tpu.memory_space<vmem>>, vector<256x128xf32>,
    %c4_i32 = arith.constant 4 : i32
    return
  }
  func.func @transform_0(%arg0: i32) -> (i32, i32) {
    %c0_i32 = arith.constant 0 : i32
    %c0_i32_0 = arith.constant 0 : i32
    return %arg0, %c0_i32 : i32, i32
  }
  func.func @transform_1(%arg0: i32) -> (i32, i32) {
    %c0_i32 = arith.constant 0 : i32
    %c0_i32_0 = arith.constant 0 : i32
    %c0_i32_1 = arith.constant 0 : i32
    return %c0_i32, %c0_i32_0 : i32, i32
  }
  func.func @transform_2(%arg0: i32) -> (i32, i32) {
    %c0_i32 = arith.constant 0 : i32
    %c0_i32_0 = arith.constant 0 : i32
    return %arg0, %c0_i32 : i32, i32
  }
}

</mosaic_0001>

<llo_original>
// kernel: tpu_custom_call.1
$region0: #{tpu_custom_call.1}
  #allocation0 [shape = 'u32[]', space=smem, size = 0x4, offset = 0x4, fixed_abs, tag = 'smem constant byte address 0x4 - core index']
  #allocation1 [shape = 'u32[144,128]{1,0:T(1,128)}', space=vmem, size = 0x12000, scoped, tag = 'internal scratch']
  %s0 = inlined_call_operand.vmem [shape: s32[16,1], index: 0, kind: input, shape index: {}]
  %s1 = inlined_call_operand.hbm [shape: f32[128,128], index: 1, kind: input, shape index: {}]
  %s2 = inlined_call_operand.hbm [shape: f32[16,128], index: 2, kind: output, shape index: {}]
  %s3 = sld [smem:[#allocation0]]
  $region22: #{tpu_custom_call.1} parent=0
    _
  %s5 = ssub.s32 1, %s3
  %s6 = scalar_select 0, %s5, %s3
  $region1: #{tpu_custom_call.1} parent=0
    #allocation2 [shape = 'u8[65536]{0}', space=vmem, size = 0x10000, scoped, tag = 'input window, operand 1, single buffered']
    #allocation3 [shape = 's32[1]{0}', space=sflag, size = 0x4, scoped, tag = 'scoped memory for tpu_custom_call.1']
    #allocation4 [shape = 's32[1]{0}', space=sflag, size = 0x4, scoped, tag = 'scoped memory for tpu_custom_call.1']
    #allocation5 [shape = 'u8[524288]{0}', space=vmem, size = 0x80000, scoped, tag = 'output window, operand 0, single buffered']
    %7 = vsyncpa [#allocation3], 0
    %8 = vsyncpa [#allocation4], 0
    // Predicated region
    $region2: #{tpu_custom_call.1} parent=1 // pred_check
      _
    $region3: #{tpu_custom_call.1} parent=1 // pred_check_branch
      %10 = sbr.rel (0) target = $region5
    $region4: #{tpu_custom_call.1} parent=1 // pred_region
      _
    $region5: #{tpu_custom_call.1} parent=1 // pred_fallthru
      _
    // Predicated region
    $region6: #{tpu_custom_call.1} parent=1 // pred_check
      _
    $region7: #{tpu_custom_call.1} parent=1 // pred_check_branch
      %12 = sbr.rel (0) target = $region9
    $region8: #{tpu_custom_call.1} parent=1 // pred_region
      %s14 = ssub.s32 2048, 2048
      %15 = vsyncadd [#allocation3], %s14
      %s16 = sshll.u32 [#allocation2], 4
      %s17 = int_to_ptr.vmem [resolvable:$true] %s16
      %22 = dma.hbm_to_vmem [thread:$0]  %s1, 2048, %s17, [#allocation3], 128, 128, 8
    $region9: #{tpu_custom_call.1} parent=1 // pred_fallthru
      _
    // Predicated region
    $region10: #{tpu_custom_call.1} parent=1 // pred_check
      _
    $region11: #{tpu_custom_call.1} parent=1 // pred_check_branch
      %24 = sbr.rel (0) target = $region13
    $region12: #{tpu_custom_call.1} parent=1 // pred_region
      %25 = dma.done [#allocation3], 2048
    $region13: #{tpu_custom_call.1} parent=1 // pred_fallthru
      _
    %v26 = vlaneseq
    %v27 = vand.u32 %v26, 127
    %v28 = vld [vmem:[%s0] sm:$0xff]
    %v29 = vld [vmem:[%s0 + $0x8] sm:$0xff]
    %v30 = vld [vmem:[%s0 + $0x10] sm:$0xff]
    %v31 = vld [vmem:[%s0 + $0x18] sm:$0xff]
    %v32 = vld [vmem:[%s0 + $0x20] sm:$0xff]
    %v33 = vld [vmem:[%s0 + $0x28] sm:$0xff]
    %v34 = vld [vmem:[%s0 + $0x30] sm:$0xff]
    %v35 = vld [vmem:[%s0 + $0x38] sm:$0xff]
    %v36 = vld [vmem:[%s0 + $0x40] sm:$0xff]
    %v37 = vld [vmem:[%s0 + $0x48] sm:$0xff]
    %v38 = vld [vmem:[%s0 + $0x50] sm:$0xff]
    %v39 = vld [vmem:[%s0 + $0x58] sm:$0xff]
    %v40 = vld [vmem:[%s0 + $0x60] sm:$0xff]
    %v41 = vld [vmem:[%s0 + $0x68] sm:$0xff]
    %v42 = vld [vmem:[%s0 + $0x70] sm:$0xff]
    %v43 = vld [vmem:[%s0 + $0x78] sm:$0xff]
    %v44 = vld [vmem:[%s0 + $0x80] sm:$0xff]
    %v45 = vld [vmem:[%s0 + $0x88] sm:$0xff]
    %v46 = vld [vmem:[%s0 + $0x90] sm:$0xff]
    %v47 = vld [vmem:[%s0 + $0x98] sm:$0xff]
    %v48 = vld [vmem:[%s0 + $0xa0] sm:$0xff]
    %v49 = vld [vmem:[%s0 + $0xa8] sm:$0xff]
    %v50 = vld [vmem:[%s0 + $0xb0] sm:$0xff]
    %v51 = vld [vmem:[%s0 + $0xb8] sm:$0xff]
    %v52 = vld [vmem:[%s0 + $0xc0] sm:$0xff]
    %v53 = vld [vmem:[%s0 + $0xc8] sm:$0xff]
    %v54 = vld [vmem:[%s0 + $0xd0] sm:$0xff]
    %v55 = vld [vmem:[%s0 + $0xd8] sm:$0xff]
    %v56 = vld [vmem:[%s0 + $0xe0] sm:$0xff]
    %v57 = vld [vmem:[%s0 + $0xe8] sm:$0xff]
    %v58 = vld [vmem:[%s0 + $0xf0] sm:$0xff]
    %v59 = vld [vmem:[%s0 + $0xf8] sm:$0xff]
    %60 = vset.pattern.permute.xlu0 0
    %61 = vperm.xlu0 %60, %v28
    %v62 = vpop.permute.xlu0 %61
    %63 = vset.pattern.permute.xlu0 0
    %64 = vperm.xlu0 %63, %v29
    %v65 = vpop.permute.xlu0 %64
    %66 = vset.pattern.permute.xlu0 0
    %67 = vperm.xlu0 %66, %v30
    %v68 = vpop.permute.xlu0 %67
    %69 = vset.pattern.permute.xlu0 0
    %70 = vperm.xlu0 %69, %v31
    %v71 = vpop.permute.xlu0 %70
    %72 = vset.pattern.permute.xlu0 0
    %73 = vperm.xlu0 %72, %v32
    %v74 = vpop.permute.xlu0 %73
    %75 = vset.pattern.permute.xlu0 0
    %76 = vperm.xlu0 %75, %v33
    %v77 = vpop.permute.xlu0 %76
    %78 = vset.pattern.permute.xlu0 0
    %79 = vperm.xlu0 %78, %v34
    %v80 = vpop.permute.xlu0 %79
    %81 = vset.pattern.permute.xlu0 0
    %82 = vperm.xlu0 %81, %v35
    %v83 = vpop.permute.xlu0 %82
    %84 = vset.pattern.permute.xlu0 0
    %85 = vperm.xlu0 %84, %v36
    %v86 = vpop.permute.xlu0 %85
    %87 = vset.pattern.permute.xlu0 0
    %88 = vperm.xlu0 %87, %v37
    %v89 = vpop.permute.xlu0 %88
    %90 = vset.pattern.permute.xlu0 0
    %91 = vperm.xlu0 %90, %v38
    %v92 = vpop.permute.xlu0 %91
    %93 = vset.pattern.permute.xlu0 0
    %94 = vperm.xlu0 %93, %v39
    %v95 = vpop.permute.xlu0 %94
    %96 = vset.pattern.permute.xlu0 0
    %97 = vperm.xlu0 %96, %v40
    %v98 = vpop.permute.xlu0 %97
    %99 = vset.pattern.permute.xlu0 0
    %100 = vperm.xlu0 %99, %v41
    %v101 = vpop.permute.xlu0 %100
    %102 = vset.pattern.permute.xlu0 0
    %103 = vperm.xlu0 %102, %v42
    %v104 = vpop.permute.xlu0 %103
    %105 = vset.pattern.permute.xlu0 0
    %106 = vperm.xlu0 %105, %v43
    %v107 = vpop.permute.xlu0 %106
    %108 = vset.pattern.permute.xlu0 0
    %109 = vperm.xlu0 %108, %v44
    %v110 = vpop.permute.xlu0 %109
    %111 = vset.pattern.permute.xlu0 0
    %112 = vperm.xlu0 %111, %v45
    %v113 = vpop.permute.xlu0 %112
    %114 = vset.pattern.permute.xlu0 0
    %115 = vperm.xlu0 %114, %v46
    %v116 = vpop.permute.xlu0 %115
    %117 = vset.pattern.permute.xlu0 0
    %118 = vperm.xlu0 %117, %v47
    %v119 = vpop.permute.xlu0 %118
    %120 = vset.pattern.permute.xlu0 0
    %121 = vperm.xlu0 %120, %v48
    %v122 = vpop.permute.xlu0 %121
    %123 = vset.pattern.permute.xlu0 0
    %124 = vperm.xlu0 %123, %v49
    %v125 = vpop.permute.xlu0 %124
    %126 = vset.pattern.permute.xlu0 0
    %127 = vperm.xlu0 %126, %v50
    %v128 = vpop.permute.xlu0 %127
    %129 = vset.pattern.permute.xlu0 0
    %130 = vperm.xlu0 %129, %v51
    %v131 = vpop.permute.xlu0 %130
    %132 = vset.pattern.permute.xlu0 0
    %133 = vperm.xlu0 %132, %v52
    %v134 = vpop.permute.xlu0 %133
    %135 = vset.pattern.permute.xlu0 0
    %136 = vperm.xlu0 %135, %v53
    %v137 = vpop.permute.xlu0 %136
    %138 = vset.pattern.permute.xlu0 0
    %139 = vperm.xlu0 %138, %v54
    %v140 = vpop.permute.xlu0 %139
    %141 = vset.pattern.permute.xlu0 0
    %142 = vperm.xlu0 %141, %v55
    %v143 = vpop.permute.xlu0 %142
    %144 = vset.pattern.permute.xlu0 0
    %145 = vperm.xlu0 %144, %v56
    %v146 = vpop.permute.xlu0 %145
    %147 = vset.pattern.permute.xlu0 0
    %148 = vperm.xlu0 %147, %v57
    %v149 = vpop.permute.xlu0 %148
    %150 = vset.pattern.permute.xlu0 0
    %151 = vperm.xlu0 %150, %v58
    %v152 = vpop.permute.xlu0 %151
    %153 = vset.pattern.permute.xlu0 0
    %154 = vperm.xlu0 %153, %v59
    %v155 = vpop.permute.xlu0 %154
    %vm156 = vcmp.eq.s32.totalorder %v62, %v27
    %vm157 = vcmp.eq.s32.totalorder %v65, %v27
    %vm158 = vcmp.eq.s32.totalorder %v68, %v27
    %vm159 = vcmp.eq.s32.totalorder %v71, %v27
    %vm160 = vcmp.eq.s32.totalorder %v74, %v27
    %vm161 = vcmp.eq.s32.totalorder %v77, %v27
    %vm162 = vcmp.eq.s32.totalorder %v80, %v27
    %vm163 = vcmp.eq.s32.totalorder %v83, %v27
    %vm164 = vcmp.eq.s32.totalorder %v86, %v27
    %vm165 = vcmp.eq.s32.totalorder %v89, %v27
    %vm166 = vcmp.eq.s32.totalorder %v92, %v27
    %vm167 = vcmp.eq.s32.totalorder %v95, %v27
    %vm168 = vcmp.eq.s32.totalorder %v98, %v27
    %vm169 = vcmp.eq.s32.totalorder %v101, %v27
    %vm170 = vcmp.eq.s32.totalorder %v104, %v27
    %vm171 = vcmp.eq.s32.totalorder %v107, %v27
    %vm172 = vcmp.eq.s32.totalorder %v110, %v27
    %vm173 = vcmp.eq.s32.totalorder %v113, %v27
    %vm174 = vcmp.eq.s32.totalorder %v116, %v27
    %vm175 = vcmp.eq.s32.totalorder %v119, %v27
    %vm176 = vcmp.eq.s32.totalorder %v122, %v27
    %vm177 = vcmp.eq.s32.totalorder %v125, %v27
    %vm178 = vcmp.eq.s32.totalorder %v128, %v27
    %vm179 = vcmp.eq.s32.totalorder %v131, %v27
    %vm180 = vcmp.eq.s32.totalorder %v134, %v27
    %vm181 = vcmp.eq.s32.totalorder %v137, %v27
    %vm182 = vcmp.eq.s32.totalorder %v140, %v27
    %vm183 = vcmp.eq.s32.totalorder %v143, %v27
    %vm184 = vcmp.eq.s32.totalorder %v146, %v27
    %vm185 = vcmp.eq.s32.totalorder %v149, %v27
    %vm186 = vcmp.eq.s32.totalorder %v152, %v27
    %vm187 = vcmp.eq.s32.totalorder %v155, %v27
    %v188 = vsel %vm156, 1, 0
    %v189 = vsel %vm157, 1, 0
    %v190 = vsel %vm158, 1, 0
    %v191 = vsel %vm159, 1, 0
    %v192 = vsel %vm160, 1, 0
    %v193 = vsel %vm161, 1, 0
    %v194 = vsel %vm162, 1, 0
    %v195 = vsel %vm163, 1, 0
    %v196 = vsel %vm164, 1, 0
    %v197 = vsel %vm165, 1, 0
    %v198 = vsel %vm166, 1, 0
    %v199 = vsel %vm167, 1, 0
    %v200 = vsel %vm168, 1, 0
    %v201 = vsel %vm169, 1, 0
    %v202 = vsel %vm170, 1, 0
    %v203 = vsel %vm171, 1, 0
    %v204 = vsel %vm172, 1, 0
    %v205 = vsel %vm173, 1, 0
    %v206 = vsel %vm174, 1, 0
    %v207 = vsel %vm175, 1, 0
    %v208 = vsel %vm176, 1, 0
    %v209 = vsel %vm177, 1, 0
    %v210 = vsel %vm178, 1, 0
    %v211 = vsel %vm179, 1, 0
    %v212 = vsel %vm180, 1, 0
    %v213 = vsel %vm181, 1, 0
    %v214 = vsel %vm182, 1, 0
    %v215 = vsel %vm183, 1, 0
    %v216 = vsel %vm184, 1, 0
    %v217 = vsel %vm185, 1, 0
    %v218 = vsel %vm186, 1, 0
    %v219 = vsel %vm187, 1, 0
    %v220 = vcvt.s32.f32 %v188
    %v221 = vcvt.s32.f32 %v189
    %v222 = vcvt.s32.f32 %v190
    %v223 = vcvt.s32.f32 %v191
    %v224 = vcvt.s32.f32 %v192
    %v225 = vcvt.s32.f32 %v193
    %v226 = vcvt.s32.f32 %v194
    %v227 = vcvt.s32.f32 %v195
    %v228 = vcvt.s32.f32 %v196
    %v229 = vcvt.s32.f32 %v197
    %v230 = vcvt.s32.f32 %v198
    %v231 = vcvt.s32.f32 %v199
    %v232 = vcvt.s32.f32 %v200
    %v233 = vcvt.s32.f32 %v201
    %v234 = vcvt.s32.f32 %v202
    %v235 = vcvt.s32.f32 %v203
    %v236 = vcvt.s32.f32 %v204
    %v237 = vcvt.s32.f32 %v205
    %v238 = vcvt.s32.f32 %v206
    %v239 = vcvt.s32.f32 %v207
    %v240 = vcvt.s32.f32 %v208
    %v241 = vcvt.s32.f32 %v209
    %v242 = vcvt.s32.f32 %v210
    %v243 = vcvt.s32.f32 %v211
    %v244 = vcvt.s32.f32 %v212
    %v245 = vcvt.s32.f32 %v213
    %v246 = vcvt.s32.f32 %v214
    %v247 = vcvt.s32.f32 %v215
    %v248 = vcvt.s32.f32 %v216
    %v249 = vcvt.s32.f32 %v217
    %v250 = vcvt.s32.f32 %v218
    %v251 = vcvt.s32.f32 %v219
    %v252 = vld [vmem:[#allocation2] sm:$0xff]
    %v253 = vld [vmem:[#allocation2 + $0x8] sm:$0xff]
    %v254 = vld [vmem:[#allocation2 + $0x10] sm:$0xff]
    %v255 = vld [vmem:[#allocation2 + $0x18] sm:$0xff]
    %v256 = vld [vmem:[#allocation2 + $0x20] sm:$0xff]
    %v257 = vld [vmem:[#allocation2 + $0x28] sm:$0xff]
    %v258 = vld [vmem:[#allocation2 + $0x30] sm:$0xff]
    %v259 = vld [vmem:[#allocation2 + $0x38] sm:$0xff]
    %v260 = vld [vmem:[#allocation2 + $0x40] sm:$0xff]
    %v261 = vld [vmem:[#allocation2 + $0x48] sm:$0xff]
    %v262 = vld [vmem:[#allocation2 + $0x50] sm:$0xff]
    %v263 = vld [vmem:[#allocation2 + $0x58] sm:$0xff]
    %v264 = vld [vmem:[#allocation2 + $0x60] sm:$0xff]
    %v265 = vld [vmem:[#allocation2 + $0x68] sm:$0xff]
    %v266 = vld [vmem:[#allocation2 + $0x70] sm:$0xff]
    %v267 = vld [vmem:[#allocation2 + $0x78] sm:$0xff]
    %268 = vmatprep.subr.mxu0 0.0
    %269 = vmatpush1.msra.mxu0 %v252
    %270 = vmatprep.subr.mxu0 0.0
    %271 = vmatpush1.msra.mxu0 %v253
    %272 = vmatprep.subr.mxu0 0.0
    %273 = vmatpush1.msra.mxu0 %v254
    %274 = vmatprep.subr.mxu0 0.0
    %275 = vmatpush1.msra.mxu0 %v255
    %276 = vmatprep.subr.mxu0 0.0
    %277 = vmatpush1.msra.mxu0 %v256
    %278 = vmatprep.subr.mxu0 0.0
    %279 = vmatpush1.msra.mxu0 %v257
    %280 = vmatprep.subr.mxu0 0.0
    %281 = vmatpush1.msra.mxu0 %v258
    %282 = vmatprep.subr.mxu0 0.0
    %283 = vmatpush1.msra.mxu0 %v259
    %284 = vmatprep.subr.mxu0 0.0
    %285 = vmatpush1.msra.mxu0 %v260
    %286 = vmatprep.subr.mxu0 0.0
    %287 = vmatpush1.msra.mxu0 %v261
    %288 = vmatprep.subr.mxu0 0.0
    %289 = vmatpush1.msra.mxu0 %v262
    %290 = vmatprep.subr.mxu0 0.0
    %291 = vmatpush1.msra.mxu0 %v263
    %292 = vmatprep.subr.mxu0 0.0
    %293 = vmatpush1.msra.mxu0 %v264
    %294 = vmatprep.subr.mxu0 0.0
    %295 = vmatpush1.msra.mxu0 %v265
    %296 = vmatprep.subr.mxu0 0.0
    %297 = vmatpush1.msra.mxu0 %v266
    %298 = vmatprep.subr.mxu0 0.0
    %299 = vmatpush1.msra.mxu0 %v267
    %300 = vmatprep.subr.mxu0 0.0
    %301 = vmatpush1.msra.mxu0 0.0
    %302 = vmatprep.subr.mxu0 0.0
    %303 = vmatpush1.msra.mxu0 0.0
    %304 = vmatprep.subr.mxu0 0.0
    %305 = vmatpush1.msra.mxu0 0.0
    %306 = vmatprep.subr.mxu0 0.0
    %307 = vmatpush1.msra.mxu0 0.0
    %308 = vmatprep.subr.mxu0 0.0
    %309 = vmatpush1.msra.mxu0 0.0
    %310 = vmatprep.subr.mxu0 0.0
    %311 = vmatpush1.msra.mxu0 0.0
    %312 = vmatprep.subr.mxu0 0.0
    %313 = vmatpush1.msra.mxu0 0.0
    %314 = vmatprep.subr.mxu0 0.0
    %315 = vmatpush1.msra.mxu0 0.0
    %316 = vmatprep.subr.mxu0 0.0
    %317 = vmatpush1.msra.mxu0 0.0
    %318 = vmatprep.subr.mxu0 0.0
    %319 = vmatpush1.msra.mxu0 0.0
    %320 = vmatprep.subr.mxu0 0.0
    %321 = vmatpush1.msra.mxu0 0.0
    %322 = vmatprep.subr.mxu0 0.0
    %323 = vmatpush1.msra.mxu0 0.0
    %324 = vmatprep.subr.mxu0 0.0
    %325 = vmatpush1.msra.mxu0 0.0
    %326 = vmatprep.subr.mxu0 0.0
    %327 = vmatpush1.msra.mxu0 0.0
    %328 = vmatprep.subr.mxu0 0.0
    %329 = vmatpush1.msra.mxu0 0.0
    %330 = vmatprep.subr.mxu0 0.0
    %331 = vmatpush1.msra.mxu0 0.0
    %332 = vmatprep.mubr.f32.mxu0 0.0
    %333 = vmatmul.mubr.f32.gmra.mrb[0].mxu0 %v220
    %v334 = vpop.f32.mrb[0].mxu0
    %v335 = vadd.f32 0.0, %v334
    %v336 = vpop.f32.mrb[0].mxu0
    %337 = vmatprep.mubr.f32.mxu0 0.0
    %338 = vmatmul.mubr.f32.gmra.mrb[0].mxu0 %v221
    %v339 = vpop.f32.mrb[0].mxu0
    %v340 = vadd.f32 0.0, %v339
    %v341 = vpop.f32.mrb[0].mxu0
    %342 = vmatprep.mubr.f32.mxu0 0.0
    %343 = vmatmul.mubr.f32.gmra.mrb[0].mxu0 %v222
    %v344 = vpop.f32.mrb[0].mxu0
    %v345 = vadd.f32 0.0, %v344
    %v346 = vpop.f32.mrb[0].mxu0
    %347 = vmatprep.mubr.f32.mxu0 0.0
    %348 = vmatmul.mubr.f32.gmra.mrb[0].mxu0 %v223
    %v349 = vpop.f32.mrb[0].mxu0
    %v350 = vadd.f32 0.0, %v349
    %v351 = vpop.f32.mrb[0].mxu0
    %352 = vmatprep.mubr.f32.mxu0 0.0
    %353 = vmatmul.mubr.f32.gmra.mrb[0].mxu0 %v224
    %v354 = vpop.f32.mrb[0].mxu0
    %v355 = vadd.f32 0.0, %v354
    %v356 = vpop.f32.mrb[0].mxu0
    %357 = vmatprep.mubr.f32.mxu0 0.0
    %358 = vmatmul.mubr.f32.gmra.mrb[0].mxu0 %v225
    %v359 = vpop.f32.mrb[0].mxu0
    %v360 = vadd.f32 0.0, %v359
    %v361 = vpop.f32.mrb[0].mxu0
    %362 = vmatprep.mubr.f32.mxu0 0.0
    %363 = vmatmul.mubr.f32.gmra.mrb[0].mxu0 %v226
    %v364 = vpop.f32.mrb[0].mxu0
    %v365 = vadd.f32 0.0, %v364
    %v366 = vpop.f32.mrb[0].mxu0
    %367 = vmatprep.mubr.f32.mxu0 0.0
    %368 = vmatmul.mubr.f32.gmra.mrb[0].mxu0 %v227
    %v369 = vpop.f32.mrb[0].mxu0
    %v370 = vadd.f32 0.0, %v369
    %v371 = vpop.f32.mrb[0].mxu0
    %372 = vmatprep.mubr.f32.mxu0 0.0
    %373 = vmatmul.mubr.f32.gmra.mrb[0].mxu0 %v228
    %v374 = vpop.f32.mrb[0].mxu0
    %v375 = vadd.f32 0.0, %v374
    %v376 = vpop.f32.mrb[0].mxu0
    %377 = vmatprep.mubr.f32.mxu0 0.0
    %378 = vmatmul.mubr.f32.gmra.mrb[0].mxu0 %v229
    %v379 = vpop.f32.mrb[0].mxu0
    %v380 = vadd.f32 0.0, %v379
    %v381 = vpop.f32.mrb[0].mxu0
    %382 = vmatprep.mubr.f32.mxu0 0.0
    %383 = vmatmul.mubr.f32.gmra.mrb[0].mxu0 %v230
    %v384 = vpop.f32.mrb[0].mxu0
    %v385 = vadd.f32 0.0, %v384
    %v386 = vpop.f32.mrb[0].mxu0
    %387 = vmatprep.mubr.f32.mxu0 0.0
    %388 = vmatmul.mubr.f32.gmra.mrb[0].mxu0 %v231
    %v389 = vpop.f32.mrb[0].mxu0
    %v390 = vadd.f32 0.0, %v389
    %v391 = vpop.f32.mrb[0].mxu0
    %392 = vmatprep.mubr.f32.mxu0 0.0
    %393 = vmatmul.mubr.f32.gmra.mrb[0].mxu0 %v232
    %v394 = vpop.f32.mrb[0].mxu0
    %v395 = vadd.f32 0.0, %v394
    %v396 = vpop.f32.mrb[0].mxu0
    %397 = vmatprep.mubr.f32.mxu0 0.0
    %398 = vmatmul.mubr.f32.gmra.mrb[0].mxu0 %v233
    %v399 = vpop.f32.mrb[0].mxu0
    %v400 = vadd.f32 0.0, %v399
    %v401 = vpop.f32.mrb[0].mxu0
    %402 = vmatprep.mubr.f32.mxu0 0.0
    %403 = vmatmul.mubr.f32.gmra.mrb[0].mxu0 %v234
    %v404 = vpop.f32.mrb[0].mxu0
    %v405 = vadd.f32 0.0, %v404
    %v406 = vpop.f32.mrb[0].mxu0
    %407 = vmatprep.mubr.f32.mxu0 0.0
    %408 = vmatmul.mubr.f32.gmra.mrb[0].mxu0 %v235
    %v409 = vpop.f32.mrb[0].mxu0
    %v410 = vadd.f32 0.0, %v409
    %v411 = vpop.f32.mrb[0].mxu0
    %412 = vmatprep.mubr.f32.mxu0 0.0
    %413 = vmatmul.mubr.f32.gmra.mrb[0].mxu0 %v236
    %v414 = vpop.f32.mrb[0].mxu0
    %v415 = vadd.f32 0.0, %v414
    %v416 = vpop.f32.mrb[0].mxu0
    %417 = vmatprep.mubr.f32.mxu0 0.0
    %418 = vmatmul.mubr.f32.gmra.mrb[0].mxu0 %v237
    %v419 = vpop.f32.mrb[0].mxu0
    %v420 = vadd.f32 0.0, %v419
    %v421 = vpop.f32.mrb[0].mxu0
    %422 = vmatprep.mubr.f32.mxu0 0.0
    %423 = vmatmul.mubr.f32.gmra.mrb[0].mxu0 %v238
    %v424 = vpop.f32.mrb[0].mxu0
    %v425 = vadd.f32 0.0, %v424
    %v426 = vpop.f32.mrb[0].mxu0
    %427 = vmatprep.mubr.f32.mxu0 0.0
    %428 = vmatmul.mubr.f32.gmra.mrb[0].mxu0 %v239
    %v429 = vpop.f32.mrb[0].mxu0
    %v430 = vadd.f32 0.0, %v429
    %v431 = vpop.f32.mrb[0].mxu0
    %432 = vmatprep.mubr.f32.mxu0 0.0
    %433 = vmatmul.mubr.f32.gmra.mrb[0].mxu0 %v240
    %v434 = vpop.f32.mrb[0].mxu0
    %v435 = vadd.f32 0.0, %v434
    %v436 = vpop.f32.mrb[0].mxu0
    %437 = vmatprep.mubr.f32.mxu0 0.0
    %438 = vmatmul.mubr.f32.gmra.mrb[0].mxu0 %v241
    %v439 = vpop.f32.mrb[0].mxu0
    %v440 = vadd.f32 0.0, %v439
    %v441 = vpop.f32.mrb[0].mxu0
    %442 = vmatprep.mubr.f32.mxu0 0.0
    %443 = vmatmul.mubr.f32.gmra.mrb[0].mxu0 %v242
    %v444 = vpop.f32.mrb[0].mxu0
    %v445 = vadd.f32 0.0, %v444
    %v446 = vpop.f32.mrb[0].mxu0
    %447 = vmatprep.mubr.f32.mxu0 0.0
    %448 = vmatmul.mubr.f32.gmra.mrb[0].mxu0 %v243
    %v449 = vpop.f32.mrb[0].mxu0
    %v450 = vadd.f32 0.0, %v449
    %v451 = vpop.f32.mrb[0].mxu0
    %452 = vmatprep.mubr.f32.mxu0 0.0
    %453 = vmatmul.mubr.f32.gmra.mrb[0].mxu0 %v244
    %v454 = vpop.f32.mrb[0].mxu0
    %v455 = vadd.f32 0.0, %v454
    %v456 = vpop.f32.mrb[0].mxu0
    %457 = vmatprep.mubr.f32.mxu0 0.0
    %458 = vmatmul.mubr.f32.gmra.mrb[0].mxu0 %v245
    %v459 = vpop.f32.mrb[0].mxu0
    %v460 = vadd.f32 0.0, %v459
    %v461 = vpop.f32.mrb[0].mxu0
    %462 = vmatprep.mubr.f32.mxu0 0.0
    %463 = vmatmul.mubr.f32.gmra.mrb[0].mxu0 %v246
    %v464 = vpop.f32.mrb[0].mxu0
    %v465 = vadd.f32 0.0, %v464
    %v466 = vpop.f32.mrb[0].mxu0
    %467 = vmatprep.mubr.f32.mxu0 0.0
    %468 = vmatmul.mubr.f32.gmra.mrb[0].mxu0 %v247
    %v469 = vpop.f32.mrb[0].mxu0
    %v470 = vadd.f32 0.0, %v469
    %v471 = vpop.f32.mrb[0].mxu0
    %472 = vmatprep.mubr.f32.mxu0 0.0
    %473 = vmatmul.mubr.f32.gmra.mrb[0].mxu0 %v248
    %v474 = vpop.f32.mrb[0].mxu0
    %v475 = vadd.f32 0.0, %v474
    %v476 = vpop.f32.mrb[0].mxu0
    %477 = vmatprep.mubr.f32.mxu0 0.0
    %478 = vmatmul.mubr.f32.gmra.mrb[0].mxu0 %v249
    %v479 = vpop.f32.mrb[0].mxu0
    %v480 = vadd.f32 0.0, %v479
    %v481 = vpop.f32.mrb[0].mxu0
    %482 = vmatprep.mubr.f32.mxu0 0.0
    %483 = vmatmul.mubr.f32.gmra.mrb[0].mxu0 %v250
    %v484 = vpop.f32.mrb[0].mxu0
    %v485 = vadd.f32 0.0, %v484
    %v486 = vpop.f32.mrb[0].mxu0
    %487 = vmatprep.mubr.f32.mxu0 0.0
    %488 = vmatmul.mubr.f32.gmra.mrb[0].mxu0 %v251
    %v489 = vpop.f32.mrb[0].mxu0
    %v490 = vadd.f32 0.0, %v489
    %v491 = vpop.f32.mrb[0].mxu0
    %492 = vdwg.mxu0
    %493 = vst [vmem:[#allocation5] sm:$0xff] %v335
    %494 = vst [vmem:[#allocation5 + $0x8] sm:$0xff] %v340
    %495 = vst [vmem:[#allocation5 + $0x10] sm:$0xff] %v345
    %496 = vst [vmem:[#allocation5 + $0x18] sm:$0xff] %v350
    %497 = vst [vmem:[#allocation5 + $0x20] sm:$0xff] %v355
    %498 = vst [vmem:[#allocation5 + $0x28] sm:$0xff] %v360
    %499 = vst [vmem:[#allocation5 + $0x30] sm:$0xff] %v365
    %500 = vst [vmem:[#allocation5 + $0x38] sm:$0xff] %v370
    %501 = vst [vmem:[#allocation5 + $0x40] sm:$0xff] %v375
    %502 = vst [vmem:[#allocation5 + $0x48] sm:$0xff] %v380
    %503 = vst [vmem:[#allocation5 + $0x50] sm:$0xff] %v385
    %504 = vst [vmem:[#allocation5 + $0x58] sm:$0xff] %v390
    %505 = vst [vmem:[#allocation5 + $0x60] sm:$0xff] %v395
    %506 = vst [vmem:[#allocation5 + $0x68] sm:$0xff] %v400
    %507 = vst [vmem:[#allocation5 + $0x70] sm:$0xff] %v405
    %508 = vst [vmem:[#allocation5 + $0x78] sm:$0xff] %v410
    %509 = vst [vmem:[#allocation5 + $0x80] sm:$0xff] %v415
    %510 = vst [vmem:[#allocation5 + $0x88] sm:$0xff] %v420
    %511 = vst [vmem:[#allocation5 + $0x90] sm:$0xff] %v425
    %512 = vst [vmem:[#allocation5 + $0x98] sm:$0xff] %v430
    %513 = vst [vmem:[#allocation5 + $0xa0] sm:$0xff] %v435
    %514 = vst [vmem:[#allocation5 + $0xa8] sm:$0xff] %v440
    %515 = vst [vmem:[#allocation5 + $0xb0] sm:$0xff] %v445
    %516 = vst [vmem:[#allocation5 + $0xb8] sm:$0xff] %v450
    %517 = vst [vmem:[#allocation5 + $0xc0] sm:$0xff] %v455
    %518 = vst [vmem:[#allocation5 + $0xc8] sm:$0xff] %v460
    %519 = vst [vmem:[#allocation5 + $0xd0] sm:$0xff] %v465
    %520 = vst [vmem:[#allocation5 + $0xd8] sm:$0xff] %v470
    %521 = vst [vmem:[#allocation5 + $0xe0] sm:$0xff] %v475
    %522 = vst [vmem:[#allocation5 + $0xe8] sm:$0xff] %v480
    %523 = vst [vmem:[#allocation5 + $0xf0] sm:$0xff] %v485
    %524 = vst [vmem:[#allocation5 + $0xf8] sm:$0xff] %v490
    %s525 = scalar_lea.vmem %s0, 256
    %v526 = vld [vmem:[%s525] sm:$0xff]
    %v527 = vld [vmem:[%s525 + $0x8] sm:$0xff]
    %v528 = vld [vmem:[%s525 + $0x10] sm:$0xff]
    %v529 = vld [vmem:[%s525 + $0x18] sm:$0xff]
    %v530 = vld [vmem:[%s525 + $0x20] sm:$0xff]
    %v531 = vld [vmem:[%s525 + $0x28] sm:$0xff]
    %v532 = vld [vmem:[%s525 + $0x30] sm:$0xff]
    %v533 = vld [vmem:[%s525 + $0x38] sm:$0xff]
    %v534 = vld [vmem:[%s525 + $0x40] sm:$0xff]
    %v535 = vld [vmem:[%s525 + $0x48] sm:$0xff]
    %v536 = vld [vmem:[%s525 + $0x50] sm:$0xff]
    %v537 = vld [vmem:[%s525 + $0x58] sm:$0xff]
    %v538 = vld [vmem:[%s525 + $0x60] sm:$0xff]
    %v539 = vld [vmem:[%s525 + $0x68] sm:$0xff]
    %v540 = vld [vmem:[%s525 + $0x70] sm:$0xff]
    %v541 = vld [vmem:[%s525 + $0x78] sm:$0xff]
    %v542 = vld [vmem:[%s525 + $0x80] sm:$0xff]
    %v543 = vld [vmem:[%s525 + $0x88] sm:$0xff]
    %v544 = vld [vmem:[%s525 + $0x90] sm:$0xff]
    %v545 = vld [vmem:[%s525 + $0x98] sm:$0xff]
    %v546 = vld [vmem:[%s525 + $0xa0] sm:$0xff]
    %v547 = vld [vmem:[%s525 + $0xa8] sm:$0xff]
    %v548 = vld [vmem:[%s525 + $0xb0] sm:$0xff]
    %v549 = vld [vmem:[%s525 + $0xb8] sm:$0xff]
    %v550 = vld [vmem:[%s525 + $0xc0] sm:$0xff]
    %v551 = vld [vmem:[%s525 + $0xc8] sm:$0xff]
    %v552 = vld [vmem:[%s525 + $0xd0] sm:$0xff]
    %v553 = vld [vmem:[%s525 + $0xd8] sm:$0xff]
    %v554 = vld [vmem:[%s525 + $0xe0] sm:$0xff]
    %v555 = vld [vmem:[%s525 + $0xe8] sm:$0xff]
    %v556 = vld [vmem:[%s525 + $0xf0] sm:$0xff]
    %v557 = vld [vmem:[%s525 + $0xf8] sm:$0xff]
    %558 = vset.pattern.permute.xlu0 0
    %559 = vperm.xlu0 %558, %v526
    %v560 = vpop.permute.xlu0 %559
    %561 = vset.pattern.permute.xlu0 0
    %562 = vperm.xlu0 %561, %v527
    %v563 = vpop.permute.xlu0 %562
    %564 = vset.pattern.permute.xlu0 0
    %565 = vperm.xlu0 %564, %v528
    %v566 = vpop.permute.xlu0 %565
    %567 = vset.pattern.permute.xlu0 0
    %568 = vperm.xlu0 %567, %v529
    %v569 = vpop.permute.xlu0 %568
    %570 = vset.pattern.permute.xlu0 0
    %571 = vperm.xlu0 %570, %v530
    %v572 = vpop.permute.xlu0 %571
    %573 = vset.pattern.permute.xlu0 0
    %574 = vperm.xlu0 %573, %v531
    %v575 = vpop.permute.xlu0 %574
    %576 = vset.pattern.permute.xlu0 0
    %577 = vperm.xlu0 %576, %v532
    %v578 = vpop.permute.xlu0 %577
    %579 = vset.pattern.permute.xlu0 0
    %580 = vperm.xlu0 %579, %v533
    %v581 = vpop.permute.xlu0 %580
    %582 = vset.pattern.permute.xlu0 0
    %583 = vperm.xlu0 %582, %v534
    %v584 = vpop.permute.xlu0 %583
    %585 = vset.pattern.permute.xlu0 0
    %586 = vperm.xlu0 %585, %v535
    %v587 = vpop.permute.xlu0 %586
    %588 = vset.pattern.permute.xlu0 0
    %589 = vperm.xlu0 %588, %v536
    %v590 = vpop.permute.xlu0 %589
    %591 = vset.pattern.permute.xlu0 0
    %592 = vperm.xlu0 %591, %v537
    %v593 = vpop.permute.xlu0 %592
    %594 = vset.pattern.permute.xlu0 0
    %595 = vperm.xlu0 %594, %v538
    %v596 = vpop.permute.xlu0 %595
    %597 = vset.pattern.permute.xlu0 0
    %598 = vperm.xlu0 %597, %v539
    %v599 = vpop.permute.xlu0 %598
    %600 = vset.pattern.permute.xlu0 0
    %601 = vperm.xlu0 %600, %v540
    %v602 = vpop.permute.xlu0 %601
    %603 = vset.pattern.permute.xlu0 0
    %604 = vperm.xlu0 %603, %v541
    %v605 = vpop.permute.xlu0 %604
    %606 = vset.pattern.permute.xlu0 0
    %607 = vperm.xlu0 %606, %v542
    %v608 = vpop.permute.xlu0 %607
    %609 = vset.pattern.permute.xlu0 0
    %610 = vperm.xlu0 %609, %v543
    %v611 = vpop.permute.xlu0 %610
    %612 = vset.pattern.permute.xlu0 0
    %613 = vperm.xlu0 %612, %v544
    %v614 = vpop.permute.xlu0 %613
    %615 = vset.pattern.permute.xlu0 0
    %616 = vperm.xlu0 %615, %v545
    %v617 = vpop.permute.xlu0 %616
    %618 = vset.pattern.permute.xlu0 0
    %619 = vperm.xlu0 %618, %v546
    %v620 = vpop.permute.xlu0 %619
    %621 = vset.pattern.permute.xlu0 0
    %622 = vperm.xlu0 %621, %v547
    %v623 = vpop.permute.xlu0 %622
    %624 = vset.pattern.permute.xlu0 0
    %625 = vperm.xlu0 %624, %v548
    %v626 = vpop.permute.xlu0 %625
    %627 = vset.pattern.permute.xlu0 0
    %628 = vperm.xlu0 %627, %v549
    %v629 = vpop.permute.xlu0 %628
    %630 = vset.pattern.permute.xlu0 0
    %631 = vperm.xlu0 %630, %v550
    %v632 = vpop.permute.xlu0 %631
    %633 = vset.pattern.permute.xlu0 0
    %634 = vperm.xlu0 %633, %v551
    %v635 = vpop.permute.xlu0 %634
    %636 = vset.pattern.permute.xlu0 0
    %637 = vperm.xlu0 %636, %v552
    %v638 = vpop.permute.xlu0 %637
    %639 = vset.pattern.permute.xlu0 0
    %640 = vperm.xlu0 %639, %v553
    %v641 = vpop.permute.xlu0 %640
    %642 = vset.pattern.permute.xlu0 0
    %643 = vperm.xlu0 %642, %v554
    %v644 = vpop.permute.xlu0 %643
    %645 = vset.pattern.permute.xlu0 0
    %646 = vperm.xlu0 %645, %v555
    %v647 = vpop.permute.xlu0 %646
    %648 = vset.pattern.permute.xlu0 0
    %649 = vperm.xlu0 %648, %v556
    %v650 = vpop.permute.xlu0 %649
    %651 = vset.pattern.permute.xlu0 0
    %652 = vperm.xlu0 %651, %v557
    %v653 = vpop.permute.xlu0 %652
    %vm654 = vcmp.eq.s32.totalorder %v560, %v27
    %vm655 = vcmp.eq.s32.totalorder %v563, %v27
    %vm656 = vcmp.eq.s32.totalorder %v566, %v27
    %vm657 = vcmp.eq.s32.totalorder %v569, %v27
    %vm658 = vcmp.eq.s32.totalorder %v572, %v27
    %vm659 = vcmp.eq.s32.totalorder %v575, %v27
    %vm660 = vcmp.eq.s32.totalorder %v578, %v27
    %vm661 = vcmp.eq.s32.totalorder %v581, %v27
    %vm662 = vcmp.eq.s32.totalorder %v584, %v27
    %vm663 = vcmp.eq.s32.totalorder %v587, %v27
    %vm664 = vcmp.eq.s32.totalorder %v590, %v27
    %vm665 = vcmp.eq.s32.totalorder %v593, %v27
    %vm666 = vcmp.eq.s32.totalorder %v596, %v27
    %vm667 = vcmp.eq.s32.totalorder %v599, %v27
    %vm668 = vcmp.eq.s32.totalorder %v602, %v27
    %vm669 = vcmp.eq.s32.totalorder %v605, %v27
    %vm670 = vcmp.eq.s32.totalorder %v608, %v27
    %vm671 = vcmp.eq.s32.totalorder %v611, %v27
    %vm672 = vcmp.eq.s32.totalorder %v614, %v27
    %vm673 = vcmp.eq.s32.totalorder %v617, %v27
    %vm674 = vcmp.eq.s32.totalorder %v620, %v27
    %vm675 = vcmp.eq.s32.totalorder %v623, %v27
    %vm676 = vcmp.eq.s32.totalorder %v626, %v27
    %vm677 = vcmp.eq.s32.totalorder %v629, %v27
    %vm678 = vcmp.eq.s32.totalorder %v632, %v27
    %vm679 = vcmp.eq.s32.totalorder %v635, %v27
    %vm680 = vcmp.eq.s32.totalorder %v638, %v27
    %vm681 = vcmp.eq.s32.totalorder %v641, %v27
    %vm682 = vcmp.eq.s32.totalorder %v644, %v27
    %vm683 = vcmp.eq.s32.totalorder %v647, %v27
    %vm684 = vcmp.eq.s32.totalorder %v650, %v27
    %vm685 = vcmp.eq.s32.totalorder %v653, %v27
    %v686 = vsel %vm654, 1, 0
    %v687 = vsel %vm655, 1, 0
    %v688 = vsel %vm656, 1, 0
    %v689 = vsel %vm657, 1, 0
    %v690 = vsel %vm658, 1, 0
    %v691 = vsel %vm659, 1, 0
    %v692 = vsel %vm660, 1, 0
    %v693 = vsel %vm661, 1, 0
    %v694 = vsel %vm662, 1, 0
    %v695 = vsel %vm663, 1, 0
    %v696 = vsel %vm664, 1, 0
    %v697 = vsel %vm665, 1, 0
    %v698 = vsel %vm666, 1, 0
    %v699 = vsel %vm667, 1, 0
    %v700 = vsel %vm668, 1, 0
    %v701 = vsel %vm669, 1, 0
    %v702 = vsel %vm670, 1, 0
    %v703 = vsel %vm671, 1, 0
    %v704 = vsel %vm672, 1, 0
    %v705 = vsel %vm673, 1, 0
    %v706 = vsel %vm674, 1, 0
    %v707 = vsel %vm675, 1, 0
    %v708 = vsel %vm676, 1, 0
    %v709 = vsel %vm677, 1, 0
    %v710 = vsel %vm678, 1, 0
    %v711 = vsel %vm679, 1, 0
    %v712 = vsel %vm680, 1, 0
    %v713 = vsel %vm681, 1, 0
    %v714 = vsel %vm682, 1, 0
    %v715 = vsel %vm683, 1, 0
    %v716 = vsel %vm684, 1, 0
    %v717 = vsel %vm685, 1, 0
    %v718 = vcvt.s32.f32 %v686
    %v719 = vcvt.s32.f32 %v687
    %v720 = vcvt.s32.f32 %v688
    %v721 = vcvt.s32.f32 %v689
    %v722 = vcvt.s32.f32 %v690
    %v723 = vcvt.s32.f32 %v691
    %v724 = vcvt.s32.f32 %v692
    %v725 = vcvt.s32.f32 %v693
    %v726 = vcvt.s32.f32 %v694
    %v727 = vcvt.s32.f32 %v695
    %v728 = vcvt.s32.f32 %v696
    %v729 = vcvt.s32.f32 %v697
    %v730 = vcvt.s32.f32 %v698
    %v731 = vcvt.s32.f32 %v699
    %v732 = vcvt.s32.f32 %v700
    %v733 = vcvt.s32.f32 %v701
    %v734 = vcvt.s32.f32 %v702
    %v735 = vcvt.s32.f32 %v703
    %v736 = vcvt.s32.f32 %v704
    %v737 = vcvt.s32.f32 %v705
    %v738 = vcvt.s32.f32 %v706
    %v739 = vcvt.s32.f32 %v707
    %v740 = vcvt.s32.f32 %v708
    %v741 = vcvt.s32.f32 %v709
    %v742 = vcvt.s32.f32 %v710
    %v743 = vcvt.s32.f32 %v711
    %v744 = vcvt.s32.f32 %v712
    %v745 = vcvt.s32.f32 %v713
    %v746 = vcvt.s32.f32 %v714
    %v747 = vcvt.s32.f32 %v715
    %v748 = vcvt.s32.f32 %v716
    %v749 = vcvt.s32.f32 %v717
    %v750 = vld [vmem:[#allocation2] sm:$0xff]
    %v751 = vld [vmem:[#allocation2 + $0x8] sm:$0xff]
    %v752 = vld [vmem:[#allocation2 + $0x10] sm:$0xff]
    %v753 = vld [vmem:[#allocation2 + $0x18] sm:$0xff]
    %v754 = vld [vmem:[#allocation2 + $0x20] sm:$0xff]
    %v755 = vld [vmem:[#allocation2 + $0x28] sm:$0xff]
    %v756 = vld [vmem:[#allocation2 + $0x30] sm:$0xff]
    %v757 = vld [vmem:[#allocation2 + $0x38] sm:$0xff]
    %v758 = vld [vmem:[#allocation2 + $0x40] sm:$0xff]
    %v759 = vld [vmem:[#allocation2 + $0x48] sm:$0xff]
    %v760 = vld [vmem:[#allocation2 + $0x50] sm:$0xff]
    %v761 = vld [vmem:[#allocation2 + $0x58] sm:$0xff]
    %v762 = vld [vmem:[#allocation2 + $0x60] sm:$0xff]
    %v763 = vld [vmem:[#allocation2 + $0x68] sm:$0xff]
    %v764 = vld [vmem:[#allocation2 + $0x70] sm:$0xff]
    %v765 = vld [vmem:[#allocation2 + $0x78] sm:$0xff]
    %766 = vmatprep.subr.mxu0 0.0
    %767 = vmatpush1.msra.mxu0 %v750
    %768 = vmatprep.subr.mxu0 0.0
    %769 = vmatpush1.msra.mxu0 %v751
    %770 = vmatprep.subr.mxu0 0.0
    %771 = vmatpush1.msra.mxu0 %v752
    %772 = vmatprep.subr.mxu0 0.0
    %773 = vmatpush1.msra.mxu0 %v753
    %774 = vmatprep.subr.mxu0 0.0
    %775 = vmatpush1.msra.mxu0 %v754
    %776 = vmatprep.subr.mxu0 0.0
    %777 = vmatpush1.msra.mxu0 %v755
    %778 = vmatprep.subr.mxu0 0.0
    %779 = vmatpush1.msra.mxu0 %v756
    %780 = vmatprep.subr.mxu0 0.0
    %781 = vmatpush1.msra.mxu0 %v757
    %782 = vmatprep.subr.mxu0 0.0
    %783 = vmatpush1.msra.mxu0 %v758
    %784 = vmatprep.subr.mxu0 0.0
    %785 = vmatpush1.msra.mxu0 %v759
    %786 = vmatprep.subr.mxu0 0.0
    %787 = vmatpush1.msra.mxu0 %v760
    %788 = vmatprep.subr.mxu0 0.0
    %789 = vmatpush1.msra.mxu0 %v761
    %790 = vmatprep.subr.mxu0 0.0
    %791 = vmatpush1.msra.mxu0 %v762
    %792 = vmatprep.subr.mxu0 0.0
    %793 = vmatpush1.msra.mxu0 %v763
    %794 = vmatprep.subr.mxu0 0.0
    %795 = vmatpush1.msra.mxu0 %v764
    %796 = vmatprep.subr.mxu0 0.0
    %797 = vmatpush1.msra.mxu0 %v765
    %798 = vmatprep.subr.mxu0 0.0
    %799 = vmatpush1.msra.mxu0 0.0
    %800 = vmatprep.subr.mxu0 0.0
    %801 = vmatpush1.msra.mxu0 0.0
    %802 = vmatprep.subr.mxu0 0.0
    %803 = vmatpush1.msra.mxu0 0.0
    %804 = vmatprep.subr.mxu0 0.0
    %805 = vmatpush1.msra.mxu0 0.0
    %806 = vmatprep.subr.mxu0 0.0
    %807 = vmatpush1.msra.mxu0 0.0
    %808 = vmatprep.subr.mxu0 0.0
    %809 = vmatpush1.msra.mxu0 0.0
    %810 = vmatprep.subr.mxu0 0.0
    %811 = vmatpush1.msra.mxu0 0.0
    %812 = vmatprep.subr.mxu0 0.0
    %813 = vmatpush1.msra.mxu0 0.0
    %814 = vmatprep.subr.mxu0 0.0
    %815 = vmatpush1.msra.mxu0 0.0
    %816 = vmatprep.subr.mxu0 0.0
    %817 = vmatpush1.msra.mxu0 0.0
    %818 = vmatprep.subr.mxu0 0.0
    %819 = vmatpush1.msra.mxu0 0.0
    %820 = vmatprep.subr.mxu0 0.0
    %821 = vmatpush1.msra.mxu0 0.0
    %822 = vmatprep.subr.mxu0 0.0
    %823 = vmatpush1.msra.mxu0 0.0
    %824 = vmatprep.subr.mxu0 0.0
    %825 = vmatpush1.msra.mxu0 0.0
    %826 = vmatprep.subr.mxu0 0.0
    %827 = vmatpush1.msra.mxu0 0.0
    %828 = vmatprep.subr.mxu0 0.0
    %829 = vmatpush1.msra.mxu0 0.0
    %830 = vmatprep.mubr.f32.mxu0 0.0
    %831 = vmatmul.mubr.f32.gmra.mrb[0].mxu0 %v718
    %v832 = vpop.f32.mrb[0].mxu0
    %v833 = vadd.f32 0.0, %v832
    %v834 = vpop.f32.mrb[0].mxu0
    %835 = vmatprep.mubr.f32.mxu0 0.0
    %836 = vmatmul.mubr.f32.gmra.mrb[0].mxu0 %v719
    %v837 = vpop.f32.mrb[0].mxu0
    %v838 = vadd.f32 0.0, %v837
    %v839 = vpop.f32.mrb[0].mxu0
    %840 = vmatprep.mubr.f32.mxu0 0.0
    %841 = vmatmul.mubr.f32.gmra.mrb[0].mxu0 %v720
    %v842 = vpop.f32.mrb[0].mxu0
    %v843 = vadd.f32 0.0, %v842
    %v844 = vpop.f32.mrb[0].mxu0
    %845 = vmatprep.mubr.f32.mxu0 0.0
    %846 = vmatmul.mubr.f32.gmra.mrb[0].mxu0 %v721
    %v847 = vpop.f32.mrb[0].mxu0
    %v848 = vadd.f32 0.0, %v847
    %v849 = vpop.f32.mrb[0].mxu0
    %850 = vmatprep.mubr.f32.mxu0 0.0
    %851 = vmatmul.mubr.f32.gmra.mrb[0].mxu0 %v722
    %v852 = vpop.f32.mrb[0].mxu0
    %v853 = vadd.f32 0.0, %v852
    %v854 = vpop.f32.mrb[0].mxu0
    %855 = vmatprep.mubr.f32.mxu0 0.0
    %856 = vmatmul.mubr.f32.gmra.mrb[0].mxu0 %v723
    %v857 = vpop.f32.mrb[0].mxu0
    %v858 = vadd.f32 0.0, %v857
    %v859 = vpop.f32.mrb[0].mxu0
    %860 = vmatprep.mubr.f32.mxu0 0.0
    %861 = vmatmul.mubr.f32.gmra.mrb[0].mxu0 %v724
    %v862 = vpop.f32.mrb[0].mxu0
    %v863 = vadd.f32 0.0, %v862
    %v864 = vpop.f32.mrb[0].mxu0
    %865 = vmatprep.mubr.f32.mxu0 0.0
    %866 = vmatmul.mubr.f32.gmra.mrb[0].mxu0 %v725
    %v867 = vpop.f32.mrb[0].mxu0
    %v868 = vadd.f32 0.0, %v867
    %v869 = vpop.f32.mrb[0].mxu0
    %870 = vmatprep.mubr.f32.mxu0 0.0
    %871 = vmatmul.mubr.f32.gmra.mrb[0].mxu0 %v726
    %v872 = vpop.f32.mrb[0].mxu0
    %v873 = vadd.f32 0.0, %v872
    %v874 = vpop.f32.mrb[0].mxu0
    %875 = vmatprep.mubr.f32.mxu0 0.0
    %876 = vmatmul.mubr.f32.gmra.mrb[0].mxu0 %v727
    %v877 = vpop.f32.mrb[0].mxu0
    %v878 = vadd.f32 0.0, %v877
    %v879 = vpop.f32.mrb[0].mxu0
    %880 = vmatprep.mubr.f32.mxu0 0.0
    %881 = vmatmul.mubr.f32.gmra.mrb[0].mxu0 %v728
    %v882 = vpop.f32.mrb[0].mxu0
    %v883 = vadd.f32 0.0, %v882
    %v884 = vpop.f32.mrb[0].mxu0
    %885 = vmatprep.mubr.f32.mxu0 0.0
    %886 = vmatmul.mubr.f32.gmra.mrb[0].mxu0 %v729
    %v887 = vpop.f32.mrb[0].mxu0
    %v888 = vadd.f32 0.0, %v887
    %v889 = vpop.f32.mrb[0].mxu0
    %890 = vmatprep.mubr.f32.mxu0 0.0
    %891 = vmatmul.mubr.f32.gmra.mrb[0].mxu0 %v730
    %v892 = vpop.f32.mrb[0].mxu0
    %v893 = vadd.f32 0.0, %v892
    %v894 = vpop.f32.mrb[0].mxu0
    %895 = vmatprep.mubr.f32.mxu0 0.0
    %896 = vmatmul.mubr.f32.gmra.mrb[0].mxu0 %v731
    %v897 = vpop.f32.mrb[0].mxu0
    %v898 = vadd.f32 0.0, %v897
    %v899 = vpop.f32.mrb[0].mxu0
    %900 = vmatprep.mubr.f32.mxu0 0.0
    %901 = vmatmul.mubr.f32.gmra.mrb[0].mxu0 %v732
    %v902 = vpop.f32.mrb[0].mxu0
    %v903 = vadd.f32 0.0, %v902
    %v904 = vpop.f32.mrb[0].mxu0
    %905 = vmatprep.mubr.f32.mxu0 0.0
    %906 = vmatmul.mubr.f32.gmra.mrb[0].mxu0 %v733
    %v907 = vpop.f32.mrb[0].mxu0
    %v908 = vadd.f32 0.0, %v907
    %v909 = vpop.f32.mrb[0].mxu0
    %910 = vmatprep.mubr.f32.mxu0 0.0
    %911 = vmatmul.mubr.f32.gmra.mrb[0].mxu0 %v734
    %v912 = vpop.f32.mrb[0].mxu0
    %v913 = vadd.f32 0.0, %v912
    %v914 = vpop.f32.mrb[0].mxu0
    %915 = vmatprep.mubr.f32.mxu0 0.0
    %916 = vmatmul.mubr.f32.gmra.mrb[0].mxu0 %v735
    %v917 = vpop.f32.mrb[0].mxu0
    %v918 = vadd.f32 0.0, %v917
    %v919 = vpop.f32.mrb[0].mxu0
    %920 = vmatprep.mubr.f32.mxu0 0.0
    %921 = vmatmul.mubr.f32.gmra.mrb[0].mxu0 %v736
    %v922 = vpop.f32.mrb[0].mxu0
    %v923 = vadd.f32 0.0, %v922
    %v924 = vpop.f32.mrb[0].mxu0
    %925 = vmatprep.mubr.f32.mxu0 0.0
    %926 = vmatmul.mubr.f32.gmra.mrb[0].mxu0 %v737
    %v927 = vpop.f32.mrb[0].mxu0
    %v928 = vadd.f32 0.0, %v927
    %v929 = vpop.f32.mrb[0].mxu0
    %930 = vmatprep.mubr.f32.mxu0 0.0
    %931 = vmatmul.mubr.f32.gmra.mrb[0].mxu0 %v738
    %v932 = vpop.f32.mrb[0].mxu0
    %v933 = vadd.f32 0.0, %v932
    %v934 = vpop.f32.mrb[0].mxu0
    %935 = vmatprep.mubr.f32.mxu0 0.0
    %936 = vmatmul.mubr.f32.gmra.mrb[0].mxu0 %v739
    %v937 = vpop.f32.mrb[0].mxu0
    %v938 = vadd.f32 0.0, %v937
    %v939 = vpop.f32.mrb[0].mxu0
    %940 = vmatprep.mubr.f32.mxu0 0.0
    %941 = vmatmul.mubr.f32.gmra.mrb[0].mxu0 %v740
    %v942 = vpop.f32.mrb[0].mxu0
    %v943 = vadd.f32 0.0, %v942
    %v944 = vpop.f32.mrb[0].mxu0
    %945 = vmatprep.mubr.f32.mxu0 0.0
    %946 = vmatmul.mubr.f32.gmra.mrb[0].mxu0 %v741
    %v947 = vpop.f32.mrb[0].mxu0
    %v948 = vadd.f32 0.0, %v947
    %v949 = vpop.f32.mrb[0].mxu0
    %950 = vmatprep.mubr.f32.mxu0 0.0
    %951 = vmatmul.mubr.f32.gmra.mrb[0].mxu0 %v742
    %v952 = vpop.f32.mrb[0].mxu0
    %v953 = vadd.f32 0.0, %v952
    %v954 = vpop.f32.mrb[0].mxu0
    %955 = vmatprep.mubr.f32.mxu0 0.0
    %956 = vmatmul.mubr.f32.gmra.mrb[0].mxu0 %v743
    %v957 = vpop.f32.mrb[0].mxu0
    %v958 = vadd.f32 0.0, %v957
    %v959 = vpop.f32.mrb[0].mxu0
    %960 = vmatprep.mubr.f32.mxu0 0.0
    %961 = vmatmul.mubr.f32.gmra.mrb[0].mxu0 %v744
    %v962 = vpop.f32.mrb[0].mxu0
    %v963 = vadd.f32 0.0, %v962
    %v964 = vpop.f32.mrb[0].mxu0
    %965 = vmatprep.mubr.f32.mxu0 0.0
    %966 = vmatmul.mubr.f32.gmra.mrb[0].mxu0 %v745
    %v967 = vpop.f32.mrb[0].mxu0
    %v968 = vadd.f32 0.0, %v967
    %v969 = vpop.f32.mrb[0].mxu0
    %970 = vmatprep.mubr.f32.mxu0 0.0
    %971 = vmatmul.mubr.f32.gmra.mrb[0].mxu0 %v746
    %v972 = vpop.f32.mrb[0].mxu0
    %v973 = vadd.f32 0.0, %v972
    %v974 = vpop.f32.mrb[0].mxu0
    %975 = vmatprep.mubr.f32.mxu0 0.0
    %976 = vmatmul.mubr.f32.gmra.mrb[0].mxu0 %v747
    %v977 = vpop.f32.mrb[0].mxu0
    %v978 = vadd.f32 0.0, %v977
    %v979 = vpop.f32.mrb[0].mxu0
    %980 = vmatprep.mubr.f32.mxu0 0.0
    %981 = vmatmul.mubr.f32.gmra.mrb[0].mxu0 %v748
    %v982 = vpop.f32.mrb[0].mxu0
    %v983 = vadd.f32 0.0, %v982
    %v984 = vpop.f32.mrb[0].mxu0
    %985 = vmatprep.mubr.f32.mxu0 0.0
    %986 = vmatmul.mubr.f32.gmra.mrb[0].mxu0 %v749
    %v987 = vpop.f32.mrb[0].mxu0
    %v988 = vadd.f32 0.0, %v987
    %v989 = vpop.f32.mrb[0].mxu0
    %990 = vdwg.mxu0
    %s991 = scalar_lea.vmem [#allocation5], 256
    %992 = vst [vmem:[%s991] sm:$0xff] %v833
    %993 = vst [vmem:[%s991 + $0x8] sm:$0xff] %v838
    %994 = vst [vmem:[%s991 + $0x10] sm:$0xff] %v843
    %995 = vst [vmem:[%s991 + $0x18] sm:$0xff] %v848
    %996 = vst [vmem:[%s991 + $0x20] sm:$0xff] %v853
    %997 = vst [vmem:[%s991 + $0x28] sm:$0xff] %v858
    %998 = vst [vmem:[%s991 + $0x30] sm:$0xff] %v863
    %999 = vst [vmem:[%s991 + $0x38] sm:$0xff] %v868
    %1000 = vst [vmem:[%s991 + $0x40] sm:$0xff] %v873
    %1001 = vst [vmem:[%s991 + $0x48] sm:$0xff] %v878
    %1002 = vst [vmem:[%s991 + $0x50] sm:$0xff] %v883
    %1003 = vst [vmem:[%s991 + $0x58] sm:$0xff] %v888
    %1004 = vst [vmem:[%s991 + $0x60] sm:$0xff] %v893
    %1005 = vst [vmem:[%s991 + $0x68] sm:$0xff] %v898
    %1006 = vst [vmem:[%s991 + $0x70] sm:$0xff] %v903
    %1007 = vst [vmem:[%s991 + $0x78] sm:$0xff] %v908
    %1008 = vst [vmem:[%s991 + $0x80] sm:$0xff] %v913
    %1009 = vst [vmem:[%s991 + $0x88] sm:$0xff] %v918
    %1010 = vst [vmem:[%s991 + $0x90] sm:$0xff] %v923
    %1011 = vst [vmem:[%s991 + $0x98] sm:$0xff] %v928
    %1012 = vst [vmem:[%s991 + $0xa0] sm:$0xff] %v933
    %1013 = vst [vmem:[%s991 + $0xa8] sm:$0xff] %v938
    %1014 = vst [vmem:[%s991 + $0xb0] sm:$0xff] %v943
    %1015 = vst [vmem:[%s991 + $0xb8] sm:$0xff] %v948
    %1016 = vst [vmem:[%s991 + $0xc0] sm:$0xff] %v953
    %1017 = vst [vmem:[%s991 + $0xc8] sm:$0xff] %v958
    %1018 = vst [vmem:[%s991 + $0xd0] sm:$0xff] %v963
    %1019 = vst [vmem:[%s991 + $0xd8] sm:$0xff] %v968
    %1020 = vst [vmem:[%s991 + $0xe0] sm:$0xff] %v973
    %1021 = vst [vmem:[%s991 + $0xe8] sm:$0xff] %v978
    %1022 = vst [vmem:[%s991 + $0xf0] sm:$0xff] %v983
    %1023 = vst [vmem:[%s991 + $0xf8] sm:$0xff] %v988
    %s1024 = scalar_lea.vmem %s0, 512
    %v1025 = vld [vmem:[%s1024] sm:$0xff]
    %v1026 = vld [vmem:[%s1024 + $0x8] sm:$0xff]
    %v1027 = vld [vmem:[%s1024 + $0x10] sm:$0xff]
    %v1028 = vld [vmem:[%s1024 + $0x18] sm:$0xff]
    %v1029 = vld [vmem:[%s1024 + $0x20] sm:$0xff]
    %v1030 = vld [vmem:[%s1024 + $0x28] sm:$0xff]
    %v1031 = vld [vmem:[%s1024 + $0x30] sm:$0xff]
    %v1032 = vld [vmem:[%s1024 + $0x38] sm:$0xff]
    %v1033 = vld [vmem:[%s1024 + $0x40] sm:$0xff]
    %v1034 = vld [vmem:[%s1024 + $0x48] sm:$0xff]
    %v1035 = vld [vmem:[%s1024 + $0x50] sm:$0xff]
    %v1036 = vld [vmem:[%s1024 + $0x58] sm:$0xff]
    %v1037 = vld [vmem:[%s1024 + $0x60] sm:$0xff]
    %v1038 = vld [vmem:[%s1024 + $0x68] sm:$0xff]
    %v1039 = vld [vmem:[%s1024 + $0x70] sm:$0xff]
    %v1040 = vld [vmem:[%s1024 + $0x78] sm:$0xff]
    %v1041 = vld [vmem:[%s1024 + $0x80] sm:$0xff]
    %v1042 = vld [vmem:[%s1024 + $0x88] sm:$0xff]
    %v1043 = vld [vmem:[%s1024 + $0x90] sm:$0xff]
    %v1044 = vld [vmem:[%s1024 + $0x98] sm:$0xff]
    %v1045 = vld [vmem:[%s1024 + $0xa0] sm:$0xff]
    %v1046 = vld [vmem:[%s1024 + $0xa8] sm:$0xff]
    %v1047 = vld [vmem:[%s1024 + $0xb0] sm:$0xff]
    %v1048 = vld [vmem:[%s1024 + $0xb8] sm:$0xff]
    %v1049 = vld [vmem:[%s1024 + $0xc0] sm:$0xff]
    %v1050 = vld [vmem:[%s1024 + $0xc8] sm:$0xff]
    %v1051 = vld [vmem:[%s1024 + $0xd0] sm:$0xff]
    %v1052 = vld [vmem:[%s1024 + $0xd8] sm:$0xff]
    %v1053 = vld [vmem:[%s1024 + $0xe0] sm:$0xff]
    %v1054 = vld [vmem:[%s1024 + $0xe8] sm:$0xff]
    %v1055 = vld [vmem:[%s1024 + $0xf0] sm:$0xff]
    %v1056 = vld [vmem:[%s1024 + $0xf8] sm:$0xff]
    %1057 = vset.pattern.permute.xlu0 0
    %1058 = vperm.xlu0 %1057, %v1025
    %v1059 = vpop.permute.xlu0 %1058
    %1060 = vset.pattern.permute.xlu0 0
    %1061 = vperm.xlu0 %1060, %v1026
    %v1062 = vpop.permute.xlu0 %1061
    %1063 = vset.pattern.permute.xlu0 0
    %1064 = vperm.xlu0 %1063, %v1027
    %v1065 = vpop.permute.xlu0 %1064
    %1066 = vset.pattern.permute.xlu0 0
    %1067 = vperm.xlu0 %1066, %v1028
    %v1068 = vpop.permute.xlu0 %1067
    %1069 = vset.pattern.permute.xlu0 0
    %1070 = vperm.xlu0 %1069, %v1029
    %v1071 = vpop.permute.xlu0 %1070
    %1072 = vset.pattern.permute.xlu0 0
    %1073 = vperm.xlu0 %1072, %v1030
    %v1074 = vpop.permute.xlu0 %1073
    %1075 = vset.pattern.permute.xlu0 0
    %1076 = vperm.xlu0 %1075, %v1031
    %v1077 = vpop.permute.xlu0 %1076
    %1078 = vset.pattern.permute.xlu0 0
    %1079 = vperm.xlu0 %1078, %v1032
    %v1080 = vpop.permute.xlu0 %1079
    %1081 = vset.pattern.permute.xlu0 0
    %1082 = vperm.xlu0 %1081, %v1033
    %v1083 = vpop.permute.xlu0 %1082
    %1084 = vset.pattern.permute.xlu0 0
    %1085 = vperm.xlu0 %1084, %v1034
    %v1086 = vpop.permute.xlu0 %1085
    %1087 = vset.pattern.permute.xlu0 0
    %1088 = vperm.xlu0 %1087, %v1035
    %v1089 = vpop.permute.xlu0 %1088
    %1090 = vset.pattern.permute.xlu0 0
    %1091 = vperm.xlu0 %1090, %v1036
    %v1092 = vpop.permute.xlu0 %1091
    %1093 = vset.pattern.permute.xlu0 0
    %1094 = vperm.xlu0 %1093, %v1037
    %v1095 = vpop.permute.xlu0 %1094
    %1096 = vset.pattern.permute.xlu0 0
    %1097 = vperm.xlu0 %1096, %v1038
    %v1098 = vpop.permute.xlu0 %1097
    %1099 = vset.pattern.permute.xlu0 0
    %1100 = vperm.xlu0 %1099, %v1039
    %v1101 = vpop.permute.xlu0 %1100
    %1102 = vset.pattern.permute.xlu0 0
    %1103 = vperm.xlu0 %1102, %v1040
    %v1104 = vpop.permute.xlu0 %1103
    %1105 = vset.pattern.permute.xlu0 0
    %1106 = vperm.xlu0 %1105, %v1041
    %v1107 = vpop.permute.xlu0 %1106
    %1108 = vset.pattern.permute.xlu0 0
    %1109 = vperm.xlu0 %1108, %v1042
    %v1110 = vpop.permute.xlu0 %1109
    %1111 = vset.pattern.permute.xlu0 0
    %1112 = vperm.xlu0 %1111, %v1043
    %v1113 = vpop.permute.xlu0 %1112
    %1114 = vset.pattern.permute.xlu0 0
    %1115 = vperm.xlu0 %1114, %v1044
    %v1116 = vpop.permute.xlu0 %1115
    %1117 = vset.pattern.permute.xlu0 0
    %1118 = vperm.xlu0 %1117, %v1045
    %v1119 = vpop.permute.xlu0 %1118
    %1120 = vset.pattern.permute.xlu0 0
    %1121 = vperm.xlu0 %1120, %v1046
    %v1122 = vpop.permute.xlu0 %1121
    %1123 = vset.pattern.permute.xlu0 0
    %1124 = vperm.xlu0 %1123, %v1047
    %v1125 = vpop.permute.xlu0 %1124
    %1126 = vset.pattern.permute.xlu0 0
    %1127 = vperm.xlu0 %1126, %v1048
    %v1128 = vpop.permute.xlu0 %1127
    %1129 = vset.pattern.permute.xlu0 0
    %1130 = vperm.xlu0 %1129, %v1049
    %v1131 = vpop.permute.xlu0 %1130
    %1132 = vset.pattern.permute.xlu0 0
    %1133 = vperm.xlu0 %1132, %v1050
    %v1134 = vpop.permute.xlu0 %1133
    %1135 = vset.pattern.permute.xlu0 0
    %1136 = vperm.xlu0 %1135, %v1051
    %v1137 = vpop.permute.xlu0 %1136
    %1138 = vset.pattern.permute.xlu0 0
    %1139 = vperm.xlu0 %1138, %v1052
    %v1140 = vpop.permute.xlu0 %1139
    %1141 = vset.pattern.permute.xlu0 0
    %1142 = vperm.xlu0 %1141, %v1053
    %v1143 = vpop.permute.xlu0 %1142
    %1144 = vset.pattern.permute.xlu0 0
    %1145 = vperm.xlu0 %1144, %v1054
    %v1146 = vpop.permute.xlu0 %1145
    %1147 = vset.pattern.permute.xlu0 0
    %1148 = vperm.xlu0 %1147, %v1055
    %v1149 = vpop.permute.xlu0 %1148
    %1150 = vset.pattern.permute.xlu0 0
    %1151 = vperm.xlu0 %1150, %v1056
    %v1152 = vpop.permute.xlu0 %1151
    %vm1153 = vcmp.eq.s32.totalorder %v1059, %v27
    %vm1154 = vcmp.eq.s32.totalorder %v1062, %v27
    %vm1155 = vcmp.eq.s32.totalorder %v1065, %v27
    %vm1156 = vcmp.eq.s32.totalorder %v1068, %v27
    %vm1157 = vcmp.eq.s32.totalorder %v1071, %v27
    %vm1158 = vcmp.eq.s32.totalorder %v1074, %v27
    %vm1159 = vcmp.eq.s32.totalorder %v1077, %v27
    %vm1160 = vcmp.eq.s32.totalorder %v1080, %v27
    %vm1161 = vcmp.eq.s32.totalorder %v1083, %v27
    %vm1162 = vcmp.eq.s32.totalorder %v1086, %v27
    %vm1163 = vcmp.eq.s32.totalorder %v1089, %v27
    %vm1164 = vcmp.eq.s32.totalorder %v1092, %v27
    %vm1165 = vcmp.eq.s32.totalorder %v1095, %v27
    %vm1166 = vcmp.eq.s32.totalorder %v1098, %v27
    %vm1167 = vcmp.eq.s32.totalorder %v1101, %v27
    %vm1168 = vcmp.eq.s32.totalorder %v1104, %v27
    %vm1169 = vcmp.eq.s32.totalorder %v1107, %v27
    %vm1170 = vcmp.eq.s32.totalorder %v1110, %v27
    %vm1171 = vcmp.eq.s32.totalorder %v1113, %v27
    %vm1172 = vcmp.eq.s32.totalorder %v1116, %v27
    %vm1173 = vcmp.eq.s32.totalorder %v1119, %v27
    %vm1174 = vcmp.eq.s32.totalorder %v1122, %v27
    %vm1175 = vcmp.eq.s32.totalorder %v1125, %v27
    %vm1176 = vcmp.eq.s32.totalorder %v1128, %v27
    %vm1177 = vcmp.eq.s32.totalorder %v1131, %v27
    %vm1178 = vcmp.eq.s32.totalorder %v1134, %v27
    %vm1179 = vcmp.eq.s32.totalorder %v1137, %v27
    %vm1180 = vcmp.eq.s32.totalorder %v1140, %v27
    %vm1181 = vcmp.eq.s32.totalorder %v1143, %v27
    %vm1182 = vcmp.eq.s32.totalorder %v1146, %v27
    %vm1183 = vcmp.eq.s32.totalorder %v1149, %v27
    %vm1184 = vcmp.eq.s32.totalorder %v1152, %v27
    %v1185 = vsel %vm1153, 1, 0
    %v1186 = vsel %vm1154, 1, 0
    %v1187 = vsel %vm1155, 1, 0
    %v1188 = vsel %vm1156, 1, 0
    %v1189 = vsel %vm1157, 1, 0
    %v1190 = vsel %vm1158, 1, 0
    %v1191 = vsel %vm1159, 1, 0
    %v1192 = vsel %vm1160, 1, 0
    %v1193 = vsel %vm1161, 1, 0
    %v1194 = vsel %vm1162, 1, 0
    %v1195 = vsel %vm1163, 1, 0
    %v1196 = vsel %vm1164, 1, 0
    %v1197 = vsel %vm1165, 1, 0
    %v1198 = vsel %vm1166, 1, 0
    %v1199 = vsel %vm1167, 1, 0
    %v1200 = vsel %vm1168, 1, 0
    %v1201 = vsel %vm1169, 1, 0
    %v1202 = vsel %vm1170, 1, 0
    %v1203 = vsel %vm1171, 1, 0
    %v1204 = vsel %vm1172, 1, 0
    %v1205 = vsel %vm1173, 1, 0
    %v1206 = vsel %vm1174, 1, 0
    %v1207 = vsel %vm1175, 1, 0
    %v1208 = vsel %vm1176, 1, 0
    %v1209 = vsel %vm1177, 1, 0
    %v1210 = vsel %vm1178, 1, 0
    %v1211 = vsel %vm1179, 1, 0
    %v1212 = vsel %vm1180, 1, 0
    %v1213 = vsel %vm1181, 1, 0
    %v1214 = vsel %vm1182, 1, 0
    %v1215 = vsel %vm1183, 1, 0
    %v1216 = vsel %vm1184, 1, 0
    %v1217 = vcvt.s32.f32 %v1185
    %v1218 = vcvt.s32.f32 %v1186
    %v1219 = vcvt.s32.f32 %v1187
    %v1220 = vcvt.s32.f32 %v1188
    %v1221 = vcvt.s32.f32 %v1189
    %v1222 = vcvt.s32.f32 %v1190
    %v1223 = vcvt.s32.f32 %v1191
    %v1224 = vcvt.s32.f32 %v1192
    %v1225 = vcvt.s32.f32 %v1193
    %v1226 = vcvt.s32.f32 %v1194
    %v1227 = vcvt.s32.f32 %v1195
    %v1228 = vcvt.s32.f32 %v1196
    %v1229 = vcvt.s32.f32 %v1197
    %v1230 = vcvt.s32.f32 %v1198
    %v1231 = vcvt.s32.f32 %v1199
    %v1232 = vcvt.s32.f32 %v1200
    %v1233 = vcvt.s32.f32 %v1201
    %v1234 = vcvt.s32.f32 %v1202
    %v1235 = vcvt.s32.f32 %v1203
    %v1236 = vcvt.s32.f32 %v1204
    %v1237 = vcvt.s32.f32 %v1205
    %v1238 = vcvt.s32.f32 %v1206
    %v1239 = vcvt.s32.f32 %v1207
    %v1240 = vcvt.s32.f32 %v1208
    %v1241 = vcvt.s32.f32 %v1209
    %v1242 = vcvt.s32.f32 %v1210
    %v1243 = vcvt.s32.f32 %v1211
    %v1244 = vcvt.s32.f32 %v1212
    %v1245 = vcvt.s32.f32 %v1213
    %v1246 = vcvt.s32.f32 %v1214
    %v1247 = vcvt.s32.f32 %v1215
    %v1248 = vcvt.s32.f32 %v1216
    %v1249 = vld [vmem:[#allocation2] sm:$0xff]
    %v1250 = vld [vmem:[#allocation2 + $0x8] sm:$0xff]
    %v1251 = vld [vmem:[#allocation2 + $0x10] sm:$0xff]
    %v1252 = vld [vmem:[#allocation2 + $0x18] sm:$0xff]
    %v1253 = vld [vmem:[#allocation2 + $0x20] sm:$0xff]
    %v1254 = vld [vmem:[#allocation2 + $0x28] sm:$0xff]
    %v1255 = vld [vmem:[#allocation2 + $0x30] sm:$0xff]
    %v1256 = vld [vmem:[#allocation2 + $0x38] sm:$0xff]
    %v1257 = vld [vmem:[#allocation2 + $0x40] sm:$0xff]
    %v1258 = vld [vmem:[#allocation2 + $0x48] sm:$0xff]
    %v1259 = vld [vmem:[#allocation2 + $0x50] sm:$0xff]
    %v1260 = vld [vmem:[#allocation2 + $0x58] sm:$0xff]
    %v1261 = vld [vmem:[#allocation2 + $0x60] sm:$0xff]
    %v1262 = vld [vmem:[#allocation2 + $0x68] sm:$0xff]
    %v1263 = vld [vmem:[#allocation2 + $0x70] sm:$0xff]
    %v1264 = vld [vmem:[#allocation2 + $0x78] sm:$0xff]
    %1265 = vmatprep.subr.mxu0 0.0
    %1266 = vmatpush1.msra.mxu0 %v1249
    %1267 = vmatprep.subr.mxu0 0.0
    %1268 = vmatpush1.msra.mxu0 %v1250
    %1269 = vmatprep.subr.mxu0 0.0
    %1270 = vmatpush1.msra.mxu0 %v1251
    %1271 = vmatprep.subr.mxu0 0.0
    %1272 = vmatpush1.msra.mxu0 %v1252
    %1273 = vmatprep.subr.mxu0 0.0
    %1274 = vmatpush1.msra.mxu0 %v1253
    %1275 = vmatprep.subr.mxu0 0.0
    %1276 = vmatpush1.msra.mxu0 %v1254
    %1277 = vmatprep.subr.mxu0 0.0
    %1278 = vmatpush1.msra.mxu0 %v1255
    %1279 = vmatprep.subr.mxu0 0.0
    %1280 = vmatpush1.msra.mxu0 %v1256
    %1281 = vmatprep.subr.mxu0 0.0
    %1282 = vmatpush1.msra.mxu0 %v1257
    %1283 = vmatprep.subr.mxu0 0.0
    %1284 = vmatpush1.msra.mxu0 %v1258
    %1285 = vmatprep.subr.mxu0 0.0
    %1286 = vmatpush1.msra.mxu0 %v1259
    %1287 = vmatprep.subr.mxu0 0.0
    %1288 = vmatpush1.msra.mxu0 %v1260
    %1289 = vmatprep.subr.mxu0 0.0
    %1290 = vmatpush1.msra.mxu0 %v1261
    %1291 = vmatprep.subr.mxu0 0.0
    %1292 = vmatpush1.msra.mxu0 %v1262
    %1293 = vmatprep.subr.mxu0 0.0
    %1294 = vmatpush1.msra.mxu0 %v1263
    %1295 = vmatprep.subr.mxu0 0.0
    %1296 = vmatpush1.msra.mxu0 %v1264
    %1297 = vmatprep.subr.mxu0 0.0
    %1298 = vmatpush1.msra.mxu0 0.0
    %1299 = vmatprep.subr.mxu0 0.0
    %1300 = vmatpush1.msra.mxu0 0.0
    %1301 = vmatprep.subr.mxu0 0.0
    %1302 = vmatpush1.msra.mxu0 0.0
    %1303 = vmatprep.subr.mxu0 0.0
    %1304 = vmatpush1.msra.mxu0 0.0
    %1305 = vmatprep.subr.mxu0 0.0
    %1306 = vmatpush1.msra.mxu0 0.0
    %1307 = vmatprep.subr.mxu0 0.0
    %1308 = vmatpush1.msra.mxu0 0.0
    %1309 = vmatprep.subr.mxu0 0.0
    %1310 = vmatpush1.msra.mxu0 0.0
    %1311 = vmatprep.subr.mxu0 0.0
    %1312 = vmatpush1.msra.mxu0 0.0
    %1313 = vmatprep.subr.mxu0 0.0
    %1314 = vmatpush1.msra.mxu0 0.0
    %1315 = vmatprep.subr.mxu0 0.0
    %1316 = vmatpush1.msra.mxu0 0.0
    %1317 = vmatprep.subr.mxu0 0.0
    %1318 = vmatpush1.msra.mxu0 0.0
    %1319 = vmatprep.subr.mxu0 0.0
    %1320 = vmatpush1.msra.mxu0 0.0
    %1321 = vmatprep.subr.mxu0 0.0
    %1322 = vmatpush1.msra.mxu0 0.0
    %1323 = vmatprep.subr.mxu0 0.0
    %1324 = vmatpush1.msra.mxu0 0.0
    %1325 = vmatprep.subr.mxu0 0.0
    %1326 = vmatpush1.msra.mxu0 0.0
    %1327 = vmatprep.subr.mxu0 0.0
    %1328 = vmatpush1.msra.mxu0 0.0
    %1329 = vmatprep.mubr.f32.mxu0 0.0
    %1330 = vmatmul.mubr.f32.gmra.mrb[0].mxu0 %v1217
    %v1331 = vpop.f32.mrb[0].mxu0
    %v1332 = vadd.f32 0.0, %v1331
    %v1333 = vpop.f32.mrb[0].mxu0
    %1334 = vmatprep.mubr.f32.mxu0 0.0
    %1335 = vmatmul.mubr.f32.gmra.mrb[0].mxu0 %v1218
    %v1336 = vpop.f32.mrb[0].mxu0
    %v1337 = vadd.f32 0.0, %v1336
    %v1338 = vpop.f32.mrb[0].mxu0
    %1339 = vmatprep.mubr.f32.mxu0 0.0
    %1340 = vmatmul.mubr.f32.gmra.mrb[0].mxu0 %v1219
    %v1341 = vpop.f32.mrb[0].mxu0
    %v1342 = vadd.f32 0.0, %v1341
    %v1343 = vpop.f32.mrb[0].mxu0
    %1344 = vmatprep.mubr.f32.mxu0 0.0
    %1345 = vmatmul.mubr.f32.gmra.mrb[0].mxu0 %v1220
    %v1346 = vpop.f32.mrb[0].mxu0
    %v1347 = vadd.f32 0.0, %v1346
    %v1348 = vpop.f32.mrb[0].mxu0
    %1349 = vmatprep.mubr.f32.mxu0 0.0
    %1350 = vmatmul.mubr.f32.gmra.mrb[0].mxu0 %v1221
    %v1351 = vpop.f32.mrb[0].mxu0
    %v1352 = vadd.f32 0.0, %v1351
    %v1353 = vpop.f32.mrb[0].mxu0
    %1354 = vmatprep.mubr.f32.mxu0 0.0
    %1355 = vmatmul.mubr.f32.gmra.mrb[0].mxu0 %v1222
    %v1356 = vpop.f32.mrb[0].mxu0
    %v1357 = vadd.f32 0.0, %v1356
    %v1358 = vpop.f32.mrb[0].mxu0
    %1359 = vmatprep.mubr.f32.mxu0 0.0
    %1360 = vmatmul.mubr.f32.gmra.mrb[0].mxu0 %v1223
    %v1361 = vpop.f32.mrb[0].mxu0
    %v1362 = vadd.f32 0.0, %v1361
    %v1363 = vpop.f32.mrb[0].mxu0
    %1364 = vmatprep.mubr.f32.mxu0 0.0
    %1365 = vmatmul.mubr.f32.gmra.mrb[0].mxu0 %v1224
    %v1366 = vpop.f32.mrb[0].mxu0
    %v1367 = vadd.f32 0.0, %v1366
    %v1368 = vpop.f32.mrb[0].mxu0
    %1369 = vmatprep.mubr.f32.mxu0 0.0
    %1370 = vmatmul.mubr.f32.gmra.mrb[0].mxu0 %v1225
    %v1371 = vpop.f32.mrb[0].mxu0
    %v1372 = vadd.f32 0.0, %v1371
    %v1373 = vpop.f32.mrb[0].mxu0
    %1374 = vmatprep.mubr.f32.mxu0 0.0
    %1375 = vmatmul.mubr.f32.gmra.mrb[0].mxu0 %v1226
    %v1376 = vpop.f32.mrb[0].mxu0
    %v1377 = vadd.f32 0.0, %v1376
    %v1378 = vpop.f32.mrb[0].mxu0
    %1379 = vmatprep.mubr.f32.mxu0 0.0
    %1380 = vmatmul.mubr.f32.gmra.mrb[0].mxu0 %v1227
    %v1381 = vpop.f32.mrb[0].mxu0
    %v1382 = vadd.f32 0.0, %v1381
    %v1383 = vpop.f32.mrb[0].mxu0
    %1384 = vmatprep.mubr.f32.mxu0 0.0
    %1385 = vmatmul.mubr.f32.gmra.mrb[0].mxu0 %v1228
    %v1386 = vpop.f32.mrb[0].mxu0
    %v1387 = vadd.f32 0.0, %v1386
    %v1388 = vpop.f32.mrb[0].mxu0
    %1389 = vmatprep.mubr.f32.mxu0 0.0
    %1390 = vmatmul.mubr.f32.gmra.mrb[0].mxu0 %v1229
    %v1391 = vpop.f32.mrb[0].mxu0
    %v1392 = vadd.f32 0.0, %v1391
    %v1393 = vpop.f32.mrb[0].mxu0
    %1394 = vmatprep.mubr.f32.mxu0 0.0
    %1395 = vmatmul.mubr.f32.gmra.mrb[0].mxu0 %v1230
    %v1396 = vpop.f32.mrb[0].mxu0
    %v1397 = vadd.f32 0.0, %v1396
    %v1398 = vpop.f32.mrb[0].mxu0
    %1399 = vmatprep.mubr.f32.mxu0 0.0
    %1400 = vmatmul.mubr.f32.gmra.mrb[0].mxu0 %v1231
    %v1401 = vpop.f32.mrb[0].mxu0
    %v1402 = vadd.f32 0.0, %v1401
    %v1403 = vpop.f32.mrb[0].mxu0
    %1404 = vmatprep.mubr.f32.mxu0 0.0
    %1405 = vmatmul.mubr.f32.gmra.mrb[0].mxu0 %v1232
    %v1406 = vpop.f32.mrb[0].mxu0
    %v1407 = vadd.f32 0.0, %v1406
    %v1408 = vpop.f32.mrb[0].mxu0
    %1409 = vmatprep.mubr.f32.mxu0 0.0
    %1410 = vmatmul.mubr.f32.gmra.mrb[0].mxu0 %v1233
    %v1411 = vpop.f32.mrb[0].mxu0
    %v1412 = vadd.f32 0.0, %v1411
    %v1413 = vpop.f32.mrb[0].mxu0
    %1414 = vmatprep.mubr.f32.mxu0 0.0
    %1415 = vmatmul.mubr.f32.gmra.mrb[0].mxu0 %v1234
    %v1416 = vpop.f32.mrb[0].mxu0
    %v1417 = vadd.f32 0.0, %v1416
    %v1418 = vpop.f32.mrb[0].mxu0
    %1419 = vmatprep.mubr.f32.mxu0 0.0
    %1420 = vmatmul.mubr.f32.gmra.mrb[0].mxu0 %v1235
    %v1421 = vpop.f32.mrb[0].mxu0
    %v1422 = vadd.f32 0.0, %v1421
    %v1423 = vpop.f32.mrb[0].mxu0
    %1424 = vmatprep.mubr.f32.mxu0 0.0
    %1425 = vmatmul.mubr.f32.gmra.mrb[0].mxu0 %v1236
    %v1426 = vpop.f32.mrb[0].mxu0
    %v1427 = vadd.f32 0.0, %v1426
    %v1428 = vpop.f32.mrb[0].mxu0
    %1429 = vmatprep.mubr.f32.mxu0 0.0
    %1430 = vmatmul.mubr.f32.gmra.mrb[0].mxu0 %v1237
    %v1431 = vpop.f32.mrb[0].mxu0
    %v1432 = vadd.f32 0.0, %v1431
    %v1433 = vpop.f32.mrb[0].mxu0
    %1434 = vmatprep.mubr.f32.mxu0 0.0
    %1435 = vmatmul.mubr.f32.gmra.mrb[0].mxu0 %v1238
    %v1436 = vpop.f32.mrb[0].mxu0
    %v1437 = vadd.f32 0.0, %v1436
    %v1438 = vpop.f32.mrb[0].mxu0
    %1439 = vmatprep.mubr.f32.mxu0 0.0
    %1440 = vmatmul.mubr.f32.gmra.mrb[0].mxu0 %v1239
    %v1441 = vpop.f32.mrb[0].mxu0
    %v1442 = vadd.f32 0.0, %v1441
    %v1443 = vpop.f32.mrb[0].mxu0
    %1444 = vmatprep.mubr.f32.mxu0 0.0
    %1445 = vmatmul.mubr.f32.gmra.mrb[0].mxu0 %v1240
    %v1446 = vpop.f32.mrb[0].mxu0
    %v1447 = vadd.f32 0.0, %v1446
    %v1448 = vpop.f32.mrb[0].mxu0
    %1449 = vmatprep.mubr.f32.mxu0 0.0
    %1450 = vmatmul.mubr.f32.gmra.mrb[0].mxu0 %v1241
    %v1451 = vpop.f32.mrb[0].mxu0
    %v1452 = vadd.f32 0.0, %v1451
    %v1453 = vpop.f32.mrb[0].mxu0
    %1454 = vmatprep.mubr.f32.mxu0 0.0
    %1455 = vmatmul.mubr.f32.gmra.mrb[0].mxu0 %v1242
    %v1456 = vpop.f32.mrb[0].mxu0
    %v1457 = vadd.f32 0.0, %v1456
    %v1458 = vpop.f32.mrb[0].mxu0
    %1459 = vmatprep.mubr.f32.mxu0 0.0
    %1460 = vmatmul.mubr.f32.gmra.mrb[0].mxu0 %v1243
    %v1461 = vpop.f32.mrb[0].mxu0
    %v1462 = vadd.f32 0.0, %v1461
    %v1463 = vpop.f32.mrb[0].mxu0
    %1464 = vmatprep.mubr.f32.mxu0 0.0
    %1465 = vmatmul.mubr.f32.gmra.mrb[0].mxu0 %v1244
    %v1466 = vpop.f32.mrb[0].mxu0
    %v1467 = vadd.f32 0.0, %v1466
    %v1468 = vpop.f32.mrb[0].mxu0
    %1469 = vmatprep.mubr.f32.mxu0 0.0
    %1470 = vmatmul.mubr.f32.gmra.mrb[0].mxu0 %v1245
    %v1471 = vpop.f32.mrb[0].mxu0
    %v1472 = vadd.f32 0.0, %v1471
    %v1473 = vpop.f32.mrb[0].mxu0
    %1474 = vmatprep.mubr.f32.mxu0 0.0
    %1475 = vmatmul.mubr.f32.gmra.mrb[0].mxu0 %v1246
    %v1476 = vpop.f32.mrb[0].mxu0
    %v1477 = vadd.f32 0.0, %v1476
    %v1478 = vpop.f32.mrb[0].mxu0
    %1479 = vmatprep.mubr.f32.mxu0 0.0
    %1480 = vmatmul.mubr.f32.gmra.mrb[0].mxu0 %v1247
    %v1481 = vpop.f32.mrb[0].mxu0
    %v1482 = vadd.f32 0.0, %v1481
    %v1483 = vpop.f32.mrb[0].mxu0
    %1484 = vmatprep.mubr.f32.mxu0 0.0
    %1485 = vmatmul.mubr.f32.gmra.mrb[0].mxu0 %v1248
    %v1486 = vpop.f32.mrb[0].mxu0
    %v1487 = vadd.f32 0.0, %v1486
    %v1488 = vpop.f32.mrb[0].mxu0
    %1489 = vdwg.mxu0
    %s1490 = scalar_lea.vmem [#allocation5], 512
    %1491 = vst [vmem:[%s1490] sm:$0xff] %v1332
    %1492 = vst [vmem:[%s1490 + $0x8] sm:$0xff] %v1337
    %1493 = vst [vmem:[%s1490 + $0x10] sm:$0xff] %v1342
    %1494 = vst [vmem:[%s1490 + $0x18] sm:$0xff] %v1347
    %1495 = vst [vmem:[%s1490 + $0x20] sm:$0xff] %v1352
    %1496 = vst [vmem:[%s1490 + $0x28] sm:$0xff] %v1357
    %1497 = vst [vmem:[%s1490 + $0x30] sm:$0xff] %v1362
    %1498 = vst [vmem:[%s1490 + $0x38] sm:$0xff] %v1367
    %1499 = vst [vmem:[%s1490 + $0x40] sm:$0xff] %v1372
    %1500 = vst [vmem:[%s1490 + $0x48] sm:$0xff] %v1377
    %1501 = vst [vmem:[%s1490 + $0x50] sm:$0xff] %v1382
    %1502 = vst [vmem:[%s1490 + $0x58] sm:$0xff] %v1387
    %1503 = vst [vmem:[%s1490 + $0x60] sm:$0xff] %v1392
    %1504 = vst [vmem:[%s1490 + $0x68] sm:$0xff] %v1397
    %1505 = vst [vmem:[%s1490 + $0x70] sm:$0xff] %v1402
    %1506 = vst [vmem:[%s1490 + $0x78] sm:$0xff] %v1407
    %1507 = vst [vmem:[%s1490 + $0x80] sm:$0xff] %v1412
    %1508 = vst [vmem:[%s1490 + $0x88] sm:$0xff] %v1417
    %1509 = vst [vmem:[%s1490 + $0x90] sm:$0xff] %v1422
    %1510 = vst [vmem:[%s1490 + $0x98] sm:$0xff] %v1427
    %1511 = vst [vmem:[%s1490 + $0xa0] sm:$0xff] %v1432
    %1512 = vst [vmem:[%s1490 + $0xa8] sm:$0xff] %v1437
    %1513 = vst [vmem:[%s1490 + $0xb0] sm:$0xff] %v1442
    %1514 = vst [vmem:[%s1490 + $0xb8] sm:$0xff] %v1447
    %1515 = vst [vmem:[%s1490 + $0xc0] sm:$0xff] %v1452
    %1516 = vst [vmem:[%s1490 + $0xc8] sm:$0xff] %v1457
    %1517 = vst [vmem:[%s1490 + $0xd0] sm:$0xff] %v1462
    %1518 = vst [vmem:[%s1490 + $0xd8] sm:$0xff] %v1467
    %1519 = vst [vmem:[%s1490 + $0xe0] sm:$0xff] %v1472
    %1520 = vst [vmem:[%s1490 + $0xe8] sm:$0xff] %v1477
    %1521 = vst [vmem:[%s1490 + $0xf0] sm:$0xff] %v1482
    %1522 = vst [vmem:[%s1490 + $0xf8] sm:$0xff] %v1487
    %s1523 = scalar_lea.vmem %s0, 768
    %v1524 = vld [vmem:[%s1523] sm:$0xff]
    %v1525 = vld [vmem:[%s1523 + $0x8] sm:$0xff]
    %v1526 = vld [vmem:[%s1523 + $0x10] sm:$0xff]
    %v1527 = vld [vmem:[%s1523 + $0x18] sm:$0xff]
    %v1528 = vld [vmem:[%s1523 + $0x20] sm:$0xff]
    %v1529 = vld [vmem:[%s1523 + $0x28] sm:$0xff]
    %v1530 = vld [vmem:[%s1523 + $0x30] sm:$0xff]
    %v1531 = vld [vmem:[%s1523 + $0x38] sm:$0xff]
    %v1532 = vld [vmem:[%s1523 + $0x40] sm:$0xff]
    %v1533 = vld [vmem:[%s1523 + $0x48] sm:$0xff]
    %v1534 = vld [vmem:[%s1523 + $0x50] sm:$0xff]
    %v1535 = vld [vmem:[%s1523 + $0x58] sm:$0xff]
    %v1536 = vld [vmem:[%s1523 + $0x60] sm:$0xff]
    %v1537 = vld [vmem:[%s1523 + $0x68] sm:$0xff]
    %v1538 = vld [vmem:[%s1523 + $0x70] sm:$0xff]
    %v1539 = vld [vmem:[%s1523 + $0x78] sm:$0xff]
    %v1540 = vld [vmem:[%s1523 + $0x80] sm:$0xff]
    %v1541 = vld [vmem:[%s1523 + $0x88] sm:$0xff]
    %v1542 = vld [vmem:[%s1523 + $0x90] sm:$0xff]
    %v1543 = vld [vmem:[%s1523 + $0x98] sm:$0xff]
    %v1544 = vld [vmem:[%s1523 + $0xa0] sm:$0xff]
    %v1545 = vld [vmem:[%s1523 + $0xa8] sm:$0xff]
    %v1546 = vld [vmem:[%s1523 + $0xb0] sm:$0xff]
    %v1547 = vld [vmem:[%s1523 + $0xb8] sm:$0xff]
    %v1548 = vld [vmem:[%s1523 + $0xc0] sm:$0xff]
    %v1549 = vld [vmem:[%s1523 + $0xc8] sm:$0xff]
    %v1550 = vld [vmem:[%s1523 + $0xd0] sm:$0xff]
    %v1551 = vld [vmem:[%s1523 + $0xd8] sm:$0xff]
    %v1552 = vld [vmem:[%s1523 + $0xe0] sm:$0xff]
    %v1553 = vld [vmem:[%s1523 + $0xe8] sm:$0xff]
    %v1554 = vld [vmem:[%s1523 + $0xf0] sm:$0xff]
    %v1555 = vld [vmem:[%s1523 + $0xf8] sm:$0xff]
    %1556 = vset.pattern.permute.xlu0 0
    %1557 = vperm.xlu0 %1556, %v1524
    %v1558 = vpop.permute.xlu0 %1557
    %1559 = vset.pattern.permute.xlu0 0
    %1560 = vperm.xlu0 %1559, %v1525
    %v1561 = vpop.permute.xlu0 %1560
    %1562 = vset.pattern.permute.xlu0 0
    %1563 = vperm.xlu0 %1562, %v1526
    %v1564 = vpop.permute.xlu0 %1563
    %1565 = vset.pattern.permute.xlu0 0
    %1566 = vperm.xlu0 %1565, %v1527
    %v1567 = vpop.permute.xlu0 %1566
    %1568 = vset.pattern.permute.xlu0 0
    %1569 = vperm.xlu0 %1568, %v1528
    %v1570 = vpop.permute.xlu0 %1569
    %1571 = vset.pattern.permute.xlu0 0
    %1572 = vperm.xlu0 %1571, %v1529
    %v1573 = vpop.permute.xlu0 %1572
    %1574 = vset.pattern.permute.xlu0 0
    %1575 = vperm.xlu0 %1574, %v1530
    %v1576 = vpop.permute.xlu0 %1575
    %1577 = vset.pattern.permute.xlu0 0
    %1578 = vperm.xlu0 %1577, %v1531
    %v1579 = vpop.permute.xlu0 %1578
    %1580 = vset.pattern.permute.xlu0 0
    %1581 = vperm.xlu0 %1580, %v1532
    %v1582 = vpop.permute.xlu0 %1581
    %1583 = vset.pattern.permute.xlu0 0
    %1584 = vperm.xlu0 %1583, %v1533
    %v1585 = vpop.permute.xlu0 %1584
    %1586 = vset.pattern.permute.xlu0 0
    %1587 = vperm.xlu0 %1586, %v1534
    %v1588 = vpop.permute.xlu0 %1587
    %1589 = vset.pattern.permute.xlu0 0
    %1590 = vperm.xlu0 %1589, %v1535
    %v1591 = vpop.permute.xlu0 %1590
    %1592 = vset.pattern.permute.xlu0 0
    %1593 = vperm.xlu0 %1592, %v1536
    %v1594 = vpop.permute.xlu0 %1593
    %1595 = vset.pattern.permute.xlu0 0
    %1596 = vperm.xlu0 %1595, %v1537
    %v1597 = vpop.permute.xlu0 %1596
    %1598 = vset.pattern.permute.xlu0 0
    %1599 = vperm.xlu0 %1598, %v1538
    %v1600 = vpop.permute.xlu0 %1599
    %1601 = vset.pattern.permute.xlu0 0
    %1602 = vperm.xlu0 %1601, %v1539
    %v1603 = vpop.permute.xlu0 %1602
    %1604 = vset.pattern.permute.xlu0 0
    %1605 = vperm.xlu0 %1604, %v1540
    %v1606 = vpop.permute.xlu0 %1605
    %1607 = vset.pattern.permute.xlu0 0
    %1608 = vperm.xlu0 %1607, %v1541
    %v1609 = vpop.permute.xlu0 %1608
    %1610 = vset.pattern.permute.xlu0 0
    %1611 = vperm.xlu0 %1610, %v1542
    %v1612 = vpop.permute.xlu0 %1611
    %1613 = vset.pattern.permute.xlu0 0
    %1614 = vperm.xlu0 %1613, %v1543
    %v1615 = vpop.permute.xlu0 %1614
    %1616 = vset.pattern.permute.xlu0 0
    %1617 = vperm.xlu0 %1616, %v1544
    %v1618 = vpop.permute.xlu0 %1617
    %1619 = vset.pattern.permute.xlu0 0
    %1620 = vperm.xlu0 %1619, %v1545
    %v1621 = vpop.permute.xlu0 %1620
    %1622 = vset.pattern.permute.xlu0 0
    %1623 = vperm.xlu0 %1622, %v1546
    %v1624 = vpop.permute.xlu0 %1623
    %1625 = vset.pattern.permute.xlu0 0
    %1626 = vperm.xlu0 %1625, %v1547
    %v1627 = vpop.permute.xlu0 %1626
    %1628 = vset.pattern.permute.xlu0 0
    %1629 = vperm.xlu0 %1628, %v1548
    %v1630 = vpop.permute.xlu0 %1629
    %1631 = vset.pattern.permute.xlu0 0
    %1632 = vperm.xlu0 %1631, %v1549
    %v1633 = vpop.permute.xlu0 %1632
    %1634 = vset.pattern.permute.xlu0 0
    %1635 = vperm.xlu0 %1634, %v1550
    %v1636 = vpop.permute.xlu0 %1635
    %1637 = vset.pattern.permute.xlu0 0
    %1638 = vperm.xlu0 %1637, %v1551
    %v1639 = vpop.permute.xlu0 %1638
    %1640 = vset.pattern.permute.xlu0 0
    %1641 = vperm.xlu0 %1640, %v1552
    %v1642 = vpop.permute.xlu0 %1641
    %1643 = vset.pattern.permute.xlu0 0
    %1644 = vperm.xlu0 %1643, %v1553
    %v1645 = vpop.permute.xlu0 %1644
    %1646 = vset.pattern.permute.xlu0 0
    %1647 = vperm.xlu0 %1646, %v1554
    %v1648 = vpop.permute.xlu0 %1647
    %1649 = vset.pattern.permute.xlu0 0
    %1650 = vperm.xlu0 %1649, %v1555
    %v1651 = vpop.permute.xlu0 %1650
    %vm1652 = vcmp.eq.s32.totalorder %v1558, %v27
    %vm1653 = vcmp.eq.s32.totalorder %v1561, %v27
    %vm1654 = vcmp.eq.s32.totalorder %v1564, %v27
    %vm1655 = vcmp.eq.s32.totalorder %v1567, %v27
    %vm1656 = vcmp.eq.s32.totalorder %v1570, %v27
    %vm1657 = vcmp.eq.s32.totalorder %v1573, %v27
    %vm1658 = vcmp.eq.s32.totalorder %v1576, %v27
    %vm1659 = vcmp.eq.s32.totalorder %v1579, %v27
    %vm1660 = vcmp.eq.s32.totalorder %v1582, %v27
    %vm1661 = vcmp.eq.s32.totalorder %v1585, %v27
    %vm1662 = vcmp.eq.s32.totalorder %v1588, %v27
    %vm1663 = vcmp.eq.s32.totalorder %v1591, %v27
    %vm1664 = vcmp.eq.s32.totalorder %v1594, %v27
    %vm1665 = vcmp.eq.s32.totalorder %v1597, %v27
    %vm1666 = vcmp.eq.s32.totalorder %v1600, %v27
    %vm1667 = vcmp.eq.s32.totalorder %v1603, %v27
    %vm1668 = vcmp.eq.s32.totalorder %v1606, %v27
    %vm1669 = vcmp.eq.s32.totalorder %v1609, %v27
    %vm1670 = vcmp.eq.s32.totalorder %v1612, %v27
    %vm1671 = vcmp.eq.s32.totalorder %v1615, %v27
    %vm1672 = vcmp.eq.s32.totalorder %v1618, %v27
    %vm1673 = vcmp.eq.s32.totalorder %v1621, %v27
    %vm1674 = vcmp.eq.s32.totalorder %v1624, %v27
    %vm1675 = vcmp.eq.s32.totalorder %v1627, %v27
    %vm1676 = vcmp.eq.s32.totalorder %v1630, %v27
    %vm1677 = vcmp.eq.s32.totalorder %v1633, %v27
    %vm1678 = vcmp.eq.s32.totalorder %v1636, %v27
    %vm1679 = vcmp.eq.s32.totalorder %v1639, %v27
    %vm1680 = vcmp.eq.s32.totalorder %v1642, %v27
    %vm1681 = vcmp.eq.s32.totalorder %v1645, %v27
    %vm1682 = vcmp.eq.s32.totalorder %v1648, %v27
    %vm1683 = vcmp.eq.s32.totalorder %v1651, %v27
    %v1684 = vsel %vm1652, 1, 0
    %v1685 = vsel %vm1653, 1, 0
    %v1686 = vsel %vm1654, 1, 0
    %v1687 = vsel %vm1655, 1, 0
    %v1688 = vsel %vm1656, 1, 0
    %v1689 = vsel %vm1657, 1, 0
    %v1690 = vsel %vm1658, 1, 0
    %v1691 = vsel %vm1659, 1, 0
    %v1692 = vsel %vm1660, 1, 0
    %v1693 = vsel %vm1661, 1, 0
    %v1694 = vsel %vm1662, 1, 0
    %v1695 = vsel %vm1663, 1, 0
    %v1696 = vsel %vm1664, 1, 0
    %v1697 = vsel %vm1665, 1, 0
    %v1698 = vsel %vm1666, 1, 0
    %v1699 = vsel %vm1667, 1, 0
    %v1700 = vsel %vm1668, 1, 0
    %v1701 = vsel %vm1669, 1, 0
    %v1702 = vsel %vm1670, 1, 0
    %v1703 = vsel %vm1671, 1, 0
    %v1704 = vsel %vm1672, 1, 0
    %v1705 = vsel %vm1673, 1, 0
    %v1706 = vsel %vm1674, 1, 0
    %v1707 = vsel %vm1675, 1, 0
    %v1708 = vsel %vm1676, 1, 0
    %v1709 = vsel %vm1677, 1, 0
    %v1710 = vsel %vm1678, 1, 0
    %v1711 = vsel %vm1679, 1, 0
    %v1712 = vsel %vm1680, 1, 0
    %v1713 = vsel %vm1681, 1, 0
    %v1714 = vsel %vm1682, 1, 0
    %v1715 = vsel %vm1683, 1, 0
    %v1716 = vcvt.s32.f32 %v1684
    %v1717 = vcvt.s32.f32 %v1685
    %v1718 = vcvt.s32.f32 %v1686
    %v1719 = vcvt.s32.f32 %v1687
    %v1720 = vcvt.s32.f32 %v1688
    %v1721 = vcvt.s32.f32 %v1689
    %v1722 = vcvt.s32.f32 %v1690
    %v1723 = vcvt.s32.f32 %v1691
    %v1724 = vcvt.s32.f32 %v1692
    %v1725 = vcvt.s32.f32 %v1693
    %v1726 = vcvt.s32.f32 %v1694
    %v1727 = vcvt.s32.f32 %v1695
    %v1728 = vcvt.s32.f32 %v1696
    %v1729 = vcvt.s32.f32 %v1697
    %v1730 = vcvt.s32.f32 %v1698
    %v1731 = vcvt.s32.f32 %v1699
    %v1732 = vcvt.s32.f32 %v1700
    %v1733 = vcvt.s32.f32 %v1701
    %v1734 = vcvt.s32.f32 %v1702
    %v1735 = vcvt.s32.f32 %v1703
    %v1736 = vcvt.s32.f32 %v1704
    %v1737 = vcvt.s32.f32 %v1705
    %v1738 = vcvt.s32.f32 %v1706
    %v1739 = vcvt.s32.f32 %v1707
    %v1740 = vcvt.s32.f32 %v1708
    %v1741 = vcvt.s32.f32 %v1709
    %v1742 = vcvt.s32.f32 %v1710
    %v1743 = vcvt.s32.f32 %v1711
    %v1744 = vcvt.s32.f32 %v1712
    %v1745 = vcvt.s32.f32 %v1713
    %v1746 = vcvt.s32.f32 %v1714
    %v1747 = vcvt.s32.f32 %v1715
    %v1748 = vld [vmem:[#allocation2] sm:$0xff]
    %v1749 = vld [vmem:[#allocation2 + $0x8] sm:$0xff]
    %v1750 = vld [vmem:[#allocation2 + $0x10] sm:$0xff]
    %v1751 = vld [vmem:[#allocation2 + $0x18] sm:$0xff]
    %v1752 = vld [vmem:[#allocation2 + $0x20] sm:$0xff]
    %v1753 = vld [vmem:[#allocation2 + $0x28] sm:$0xff]
    %v1754 = vld [vmem:[#allocation2 + $0x30] sm:$0xff]
    %v1755 = vld [vmem:[#allocation2 + $0x38] sm:$0xff]
    %v1756 = vld [vmem:[#allocation2 + $0x40] sm:$0xff]
    %v1757 = vld [vmem:[#allocation2 + $0x48] sm:$0xff]
    %v1758 = vld [vmem:[#allocation2 + $0x50] sm:$0xff]
    %v1759 = vld [vmem:[#allocation2 + $0x58] sm:$0xff]
    %v1760 = vld [vmem:[#allocation2 + $0x60] sm:$0xff]
    %v1761 = vld [vmem:[#allocation2 + $0x68] sm:$0xff]
    %v1762 = vld [vmem:[#allocation2 + $0x70] sm:$0xff]
    %v1763 = vld [vmem:[#allocation2 + $0x78] sm:$0xff]
    %1764 = vmatprep.subr.mxu0 0.0
    %1765 = vmatpush1.msra.mxu0 %v1748
    %1766 = vmatprep.subr.mxu0 0.0
    %1767 = vmatpush1.msra.mxu0 %v1749
    %1768 = vmatprep.subr.mxu0 0.0
    %1769 = vmatpush1.msra.mxu0 %v1750
    %1770 = vmatprep.subr.mxu0 0.0
    %1771 = vmatpush1.msra.mxu0 %v1751
    %1772 = vmatprep.subr.mxu0 0.0
    %1773 = vmatpush1.msra.mxu0 %v1752
    %1774 = vmatprep.subr.mxu0 0.0
    %1775 = vmatpush1.msra.mxu0 %v1753
    %1776 = vmatprep.subr.mxu0 0.0
    %1777 = vmatpush1.msra.mxu0 %v1754
    %1778 = vmatprep.subr.mxu0 0.0
    %1779 = vmatpush1.msra.mxu0 %v1755
    %1780 = vmatprep.subr.mxu0 0.0
    %1781 = vmatpush1.msra.mxu0 %v1756
    %1782 = vmatprep.subr.mxu0 0.0
    %1783 = vmatpush1.msra.mxu0 %v1757
    %1784 = vmatprep.subr.mxu0 0.0
    %1785 = vmatpush1.msra.mxu0 %v1758
    %1786 = vmatprep.subr.mxu0 0.0
    %1787 = vmatpush1.msra.mxu0 %v1759
    %1788 = vmatprep.subr.mxu0 0.0
    %1789 = vmatpush1.msra.mxu0 %v1760
    %1790 = vmatprep.subr.mxu0 0.0
    %1791 = vmatpush1.msra.mxu0 %v1761
    %1792 = vmatprep.subr.mxu0 0.0
    %1793 = vmatpush1.msra.mxu0 %v1762
    %1794 = vmatprep.subr.mxu0 0.0
    %1795 = vmatpush1.msra.mxu0 %v1763
    %1796 = vmatprep.subr.mxu0 0.0
    %1797 = vmatpush1.msra.mxu0 0.0
    %1798 = vmatprep.subr.mxu0 0.0
    %1799 = vmatpush1.msra.mxu0 0.0
    %1800 = vmatprep.subr.mxu0 0.0
    %1801 = vmatpush1.msra.mxu0 0.0
    %1802 = vmatprep.subr.mxu0 0.0
    %1803 = vmatpush1.msra.mxu0 0.0
    %1804 = vmatprep.subr.mxu0 0.0
    %1805 = vmatpush1.msra.mxu0 0.0
    %1806 = vmatprep.subr.mxu0 0.0
    %1807 = vmatpush1.msra.mxu0 0.0
    %1808 = vmatprep.subr.mxu0 0.0
    %1809 = vmatpush1.msra.mxu0 0.0
    %1810 = vmatprep.subr.mxu0 0.0
    %1811 = vmatpush1.msra.mxu0 0.0
    %1812 = vmatprep.subr.mxu0 0.0
    %1813 = vmatpush1.msra.mxu0 0.0
    %1814 = vmatprep.subr.mxu0 0.0
    %1815 = vmatpush1.msra.mxu0 0.0
    %1816 = vmatprep.subr.mxu0 0.0
    %1817 = vmatpush1.msra.mxu0 0.0
    %1818 = vmatprep.subr.mxu0 0.0
    %1819 = vmatpush1.msra.mxu0 0.0
    %1820 = vmatprep.subr.mxu0 0.0
    %1821 = vmatpush1.msra.mxu0 0.0
    %1822 = vmatprep.subr.mxu0 0.0
    %1823 = vmatpush1.msra.mxu0 0.0
    %1824 = vmatprep.subr.mxu0 0.0
    %1825 = vmatpush1.msra.mxu0 0.0
    %1826 = vmatprep.subr.mxu0 0.0
    %1827 = vmatpush1.msra.mxu0 0.0
    %1828 = vmatprep.mubr.f32.mxu0 0.0
    %1829 = vmatmul.mubr.f32.gmra.mrb[0].mxu0 %v1716
    %v1830 = vpop.f32.mrb[0].mxu0
    %v1831 = vadd.f32 0.0, %v1830
    %v1832 = vpop.f32.mrb[0].mxu0
    %1833 = vmatprep.mubr.f32.mxu0 0.0
    %1834 = vmatmul.mubr.f32.gmra.mrb[0].mxu0 %v1717
    %v1835 = vpop.f32.mrb[0].mxu0
    %v1836 = vadd.f32 0.0, %v1835
    %v1837 = vpop.f32.mrb[0].mxu0
    %1838 = vmatprep.mubr.f32.mxu0 0.0
    %1839 = vmatmul.mubr.f32.gmra.mrb[0].mxu0 %v1718
    %v1840 = vpop.f32.mrb[0].mxu0
    %v1841 = vadd.f32 0.0, %v1840
    %v1842 = vpop.f32.mrb[0].mxu0
    %1843 = vmatprep.mubr.f32.mxu0 0.0
    %1844 = vmatmul.mubr.f32.gmra.mrb[0].mxu0 %v1719
    %v1845 = vpop.f32.mrb[0].mxu0
    %v1846 = vadd.f32 0.0, %v1845
    %v1847 = vpop.f32.mrb[0].mxu0
    %1848 = vmatprep.mubr.f32.mxu0 0.0
    %1849 = vmatmul.mubr.f32.gmra.mrb[0].mxu0 %v1720
    %v1850 = vpop.f32.mrb[0].mxu0
    %v1851 = vadd.f32 0.0, %v1850
    %v1852 = vpop.f32.mrb[0].mxu0
    %1853 = vmatprep.mubr.f32.mxu0 0.0
    %1854 = vmatmul.mubr.f32.gmra.mrb[0].mxu0 %v1721
    %v1855 = vpop.f32.mrb[0].mxu0
    %v1856 = vadd.f32 0.0, %v1855
    %v1857 = vpop.f32.mrb[0].mxu0
    %1858 = vmatprep.mubr.f32.mxu0 0.0
    %1859 = vmatmul.mubr.f32.gmra.mrb[0].mxu0 %v1722
    %v1860 = vpop.f32.mrb[0].mxu0
    %v1861 = vadd.f32 0.0, %v1860
    %v1862 = vpop.f32.mrb[0].mxu0
    %1863 = vmatprep.mubr.f32.mxu0 0.0
    %1864 = vmatmul.mubr.f32.gmra.mrb[0].mxu0 %v1723
    %v1865 = vpop.f32.mrb[0].mxu0
    %v1866 = vadd.f32 0.0, %v1865
    %v1867 = vpop.f32.mrb[0].mxu0
    %1868 = vmatprep.mubr.f32.mxu0 0.0
    %1869 = vmatmul.mubr.f32.gmra.mrb[0].mxu0 %v1724
    %v1870 = vpop.f32.mrb[0].mxu0
    %v1871 = vadd.f32 0.0, %v1870
    %v1872 = vpop.f32.mrb[0].mxu0
    %1873 = vmatprep.mubr.f32.mxu0 0.0
    %1874 = vmatmul.mubr.f32.gmra.mrb[0].mxu0 %v1725
    %v1875 = vpop.f32.mrb[0].mxu0
    %v1876 = vadd.f32 0.0, %v1875
    %v1877 = vpop.f32.mrb[0].mxu0
    %1878 = vmatprep.mubr.f32.mxu0 0.0
    %1879 = vmatmul.mubr.f32.gmra.mrb[0].mxu0 %v1726
    %v1880 = vpop.f32.mrb[0].mxu0
    %v1881 = vadd.f32 0.0, %v1880
    %v1882 = vpop.f32.mrb[0].mxu0
    %1883 = vmatprep.mubr.f32.mxu0 0.0
    %1884 = vmatmul.mubr.f32.gmra.mrb[0].mxu0 %v1727
    %v1885 = vpop.f32.mrb[0].mxu0
    %v1886 = vadd.f32 0.0, %v1885
    %v1887 = vpop.f32.mrb[0].mxu0
    %1888 = vmatprep.mubr.f32.mxu0 0.0
    %1889 = vmatmul.mubr.f32.gmra.mrb[0].mxu0 %v1728
    %v1890 = vpop.f32.mrb[0].mxu0
    %v1891 = vadd.f32 0.0, %v1890
    %v1892 = vpop.f32.mrb[0].mxu0
    %1893 = vmatprep.mubr.f32.mxu0 0.0
    %1894 = vmatmul.mubr.f32.gmra.mrb[0].mxu0 %v1729
    %v1895 = vpop.f32.mrb[0].mxu0
    %v1896 = vadd.f32 0.0, %v1895
    %v1897 = vpop.f32.mrb[0].mxu0
    %1898 = vmatprep.mubr.f32.mxu0 0.0
    %1899 = vmatmul.mubr.f32.gmra.mrb[0].mxu0 %v1730
    %v1900 = vpop.f32.mrb[0].mxu0
    %v1901 = vadd.f32 0.0, %v1900
    %v1902 = vpop.f32.mrb[0].mxu0
    %1903 = vmatprep.mubr.f32.mxu0 0.0
    %1904 = vmatmul.mubr.f32.gmra.mrb[0].mxu0 %v1731
    %v1905 = vpop.f32.mrb[0].mxu0
    %v1906 = vadd.f32 0.0, %v1905
    %v1907 = vpop.f32.mrb[0].mxu0
    %1908 = vmatprep.mubr.f32.mxu0 0.0
    %1909 = vmatmul.mubr.f32.gmra.mrb[0].mxu0 %v1732
    %v1910 = vpop.f32.mrb[0].mxu0
    %v1911 = vadd.f32 0.0, %v1910
    %v1912 = vpop.f32.mrb[0].mxu0
    %1913 = vmatprep.mubr.f32.mxu0 0.0
    %1914 = vmatmul.mubr.f32.gmra.mrb[0].mxu0 %v1733
    %v1915 = vpop.f32.mrb[0].mxu0
    %v1916 = vadd.f32 0.0, %v1915
    %v1917 = vpop.f32.mrb[0].mxu0
    %1918 = vmatprep.mubr.f32.mxu0 0.0
    %1919 = vmatmul.mubr.f32.gmra.mrb[0].mxu0 %v1734
    %v1920 = vpop.f32.mrb[0].mxu0
    %v1921 = vadd.f32 0.0, %v1920
    %v1922 = vpop.f32.mrb[0].mxu0
    %1923 = vmatprep.mubr.f32.mxu0 0.0
    %1924 = vmatmul.mubr.f32.gmra.mrb[0].mxu0 %v1735
    %v1925 = vpop.f32.mrb[0].mxu0
    %v1926 = vadd.f32 0.0, %v1925
    %v1927 = vpop.f32.mrb[0].mxu0
    %1928 = vmatprep.mubr.f32.mxu0 0.0
    %1929 = vmatmul.mubr.f32.gmra.mrb[0].mxu0 %v1736
    %v1930 = vpop.f32.mrb[0].mxu0
    %v1931 = vadd.f32 0.0, %v1930
    %v1932 = vpop.f32.mrb[0].mxu0
    %1933 = vmatprep.mubr.f32.mxu0 0.0
    %1934 = vmatmul.mubr.f32.gmra.mrb[0].mxu0 %v1737
    %v1935 = vpop.f32.mrb[0].mxu0
    %v1936 = vadd.f32 0.0, %v1935
    %v1937 = vpop.f32.mrb[0].mxu0
    %1938 = vmatprep.mubr.f32.mxu0 0.0
    %1939 = vmatmul.mubr.f32.gmra.mrb[0].mxu0 %v1738
    %v1940 = vpop.f32.mrb[0].mxu0
    %v1941 = vadd.f32 0.0, %v1940
    %v1942 = vpop.f32.mrb[0].mxu0
    %1943 = vmatprep.mubr.f32.mxu0 0.0
    %1944 = vmatmul.mubr.f32.gmra.mrb[0].mxu0 %v1739
    %v1945 = vpop.f32.mrb[0].mxu0
    %v1946 = vadd.f32 0.0, %v1945
    %v1947 = vpop.f32.mrb[0].mxu0
    %1948 = vmatprep.mubr.f32.mxu0 0.0
    %1949 = vmatmul.mubr.f32.gmra.mrb[0].mxu0 %v1740
    %v1950 = vpop.f32.mrb[0].mxu0
    %v1951 = vadd.f32 0.0, %v1950
    %v1952 = vpop.f32.mrb[0].mxu0
    %1953 = vmatprep.mubr.f32.mxu0 0.0
    %1954 = vmatmul.mubr.f32.gmra.mrb[0].mxu0 %v1741
    %v1955 = vpop.f32.mrb[0].mxu0
    %v1956 = vadd.f32 0.0, %v1955
    %v1957 = vpop.f32.mrb[0].mxu0
    %1958 = vmatprep.mubr.f32.mxu0 0.0
    %1959 = vmatmul.mubr.f32.gmra.mrb[0].mxu0 %v1742
    %v1960 = vpop.f32.mrb[0].mxu0
    %v1961 = vadd.f32 0.0, %v1960
    %v1962 = vpop.f32.mrb[0].mxu0
    %1963 = vmatprep.mubr.f32.mxu0 0.0
    %1964 = vmatmul.mubr.f32.gmra.mrb[0].mxu0 %v1743
    %v1965 = vpop.f32.mrb[0].mxu0
    %v1966 = vadd.f32 0.0, %v1965
    %v1967 = vpop.f32.mrb[0].mxu0
    %1968 = vmatprep.mubr.f32.mxu0 0.0
    %1969 = vmatmul.mubr.f32.gmra.mrb[0].mxu0 %v1744
    %v1970 = vpop.f32.mrb[0].mxu0
    %v1971 = vadd.f32 0.0, %v1970
    %v1972 = vpop.f32.mrb[0].mxu0
    %1973 = vmatprep.mubr.f32.mxu0 0.0
    %1974 = vmatmul.mubr.f32.gmra.mrb[0].mxu0 %v1745
    %v1975 = vpop.f32.mrb[0].mxu0
    %v1976 = vadd.f32 0.0, %v1975
    %v1977 = vpop.f32.mrb[0].mxu0
    %1978 = vmatprep.mubr.f32.mxu0 0.0
    %1979 = vmatmul.mubr.f32.gmra.mrb[0].mxu0 %v1746
    %v1980 = vpop.f32.mrb[0].mxu0
    %v1981 = vadd.f32 0.0, %v1980
    %v1982 = vpop.f32.mrb[0].mxu0
    %1983 = vmatprep.mubr.f32.mxu0 0.0
    %1984 = vmatmul.mubr.f32.gmra.mrb[0].mxu0 %v1747
    %v1985 = vpop.f32.mrb[0].mxu0
    %v1986 = vadd.f32 0.0, %v1985
    %v1987 = vpop.f32.mrb[0].mxu0
    %1988 = vdwg.mxu0
    %s1989 = scalar_lea.vmem [#allocation5], 768
    %1990 = vst [vmem:[%s1989] sm:$0xff] %v1831
    %1991 = vst [vmem:[%s1989 + $0x8] sm:$0xff] %v1836
    %1992 = vst [vmem:[%s1989 + $0x10] sm:$0xff] %v1841
    %1993 = vst [vmem:[%s1989 + $0x18] sm:$0xff] %v1846
    %1994 = vst [vmem:[%s1989 + $0x20] sm:$0xff] %v1851
    %1995 = vst [vmem:[%s1989 + $0x28] sm:$0xff] %v1856
    %1996 = vst [vmem:[%s1989 + $0x30] sm:$0xff] %v1861
    %1997 = vst [vmem:[%s1989 + $0x38] sm:$0xff] %v1866
    %1998 = vst [vmem:[%s1989 + $0x40] sm:$0xff] %v1871
    %1999 = vst [vmem:[%s1989 + $0x48] sm:$0xff] %v1876
    %2000 = vst [vmem:[%s1989 + $0x50] sm:$0xff] %v1881
    %2001 = vst [vmem:[%s1989 + $0x58] sm:$0xff] %v1886
    %2002 = vst [vmem:[%s1989 + $0x60] sm:$0xff] %v1891
    %2003 = vst [vmem:[%s1989 + $0x68] sm:$0xff] %v1896
    %2004 = vst [vmem:[%s1989 + $0x70] sm:$0xff] %v1901
    %2005 = vst [vmem:[%s1989 + $0x78] sm:$0xff] %v1906
    %2006 = vst [vmem:[%s1989 + $0x80] sm:$0xff] %v1911
    %2007 = vst [vmem:[%s1989 + $0x88] sm:$0xff] %v1916
    %2008 = vst [vmem:[%s1989 + $0x90] sm:$0xff] %v1921
    %2009 = vst [vmem:[%s1989 + $0x98] sm:$0xff] %v1926
    %2010 = vst [vmem:[%s1989 + $0xa0] sm:$0xff] %v1931
    %2011 = vst [vmem:[%s1989 + $0xa8] sm:$0xff] %v1936
    %2012 = vst [vmem:[%s1989 + $0xb0] sm:$0xff] %v1941
    %2013 = vst [vmem:[%s1989 + $0xb8] sm:$0xff] %v1946
    %2014 = vst [vmem:[%s1989 + $0xc0] sm:$0xff] %v1951
    %2015 = vst [vmem:[%s1989 + $0xc8] sm:$0xff] %v1956
    %2016 = vst [vmem:[%s1989 + $0xd0] sm:$0xff] %v1961
    %2017 = vst [vmem:[%s1989 + $0xd8] sm:$0xff] %v1966
    %2018 = vst [vmem:[%s1989 + $0xe0] sm:$0xff] %v1971
    %2019 = vst [vmem:[%s1989 + $0xe8] sm:$0xff] %v1976
    %2020 = vst [vmem:[%s1989 + $0xf0] sm:$0xff] %v1981
    %2021 = vst [vmem:[%s1989 + $0xf8] sm:$0xff] %v1986
    // Predicated region
    $region14: #{tpu_custom_call.1} parent=1 // pred_check
      _
    $region15: #{tpu_custom_call.1} parent=1 // pred_check_branch
      %2023 = sbr.rel (0) target = $region17
    $region16: #{tpu_custom_call.1} parent=1 // pred_region
      %s2025 = ssub.s32 16384, 256
      %2026 = vsyncadd [#allocation4], %s2025
      %s2027 = sshll.u32 [#allocation5], 4
      %s2028 = int_to_ptr.vmem [resolvable:$true] %s2027
      %2033 = dma.vmem_to_hbm [thread:$0]  %s2028, 256, %s2, [#allocation4], 128, 128, 8
    $region17: #{tpu_custom_call.1} parent=1 // pred_fallthru
      _
    // Predicated region
    $region18: #{tpu_custom_call.1} parent=1 // pred_check
      _
    $region19: #{tpu_custom_call.1} parent=1 // pred_check_branch
      %2035 = sbr.rel (0) target = $region21
    $region20: #{tpu_custom_call.1} parent=1 // pred_region
      %2036 = dma.done [#allocation4], 16384
    $region21: #{tpu_custom_call.1} parent=1 // pred_fallthru
      _
    %2037 = vsyncpa [#allocation3], 1
    %2038 = vsyncpa [#allocation4], 1

</llo_original>
